<compile_context>
chip_gen: v7x
topology: tpu7x:2x2x1
jax: 0.10.0
libtpu: 0.0.40
codegen_flags: <defaults>
</compile_context>

<pallas_src>
import functools

import jax
import jax.numpy as jnp
from jax.experimental import pallas as pl
from jax.experimental.pallas import tpu as pltpu

_BN_EPS = 1e-5
_LANE = 128


def _generator_kernel(x_ref,
                      w0_ref, v0_ref,
                      w1_ref, v1_ref,
                      w2_ref, v2_ref,
                      w3_ref, v3_ref,
                      wf_ref, bf_ref,
                      o_ref):
    """Fused forward: 4x (Linear + BatchNorm1d(train) + ReLU) -> Linear -> Sigmoid.

    w*_ref : (in, out) bf16 weights.
    v*_ref : (2, out) f32 packed per-block vectors: row 0 = BN gamma, row 1 = BN beta.
             (The Linear bias is omitted: training-mode BN mean subtraction
              cancels it exactly.)
    wf_ref : (8h, im_pad) bf16 final weights (lane-padded to a multiple of 128).
    bf_ref : (1, im_pad) f32 final bias.
    """
    x = x_ref[...]                                 # (B, z_dim) f32
    batch = x.shape[0]
    inv_b = jnp.float32(1.0 / batch)

    # For large batch tiles, run the BN batch-axis reductions on the MXU
    # (ones-row matmul) so they overlap with the surrounding dots instead of
    # serializing on the XLU.  `batch` is static, so this is a trace-time
    # choice; at small batch the plain sublane reduction is cheaper.
    use_mxu_stats = batch >= 128
    ones_row = jnp.ones((1, batch), jnp.float32) if use_mxu_stats else None

    def batch_mean(t):
        if use_mxu_stats:
            return jnp.dot(ones_row, t, preferred_element_type=jnp.float32) * inv_b
        return jnp.mean(t, axis=0, keepdims=True)

    def block(x_bf16, w_ref, v_ref):
        v = v_ref[...]                             # (2, out) f32: gamma, beta
        # MXU matmul in bf16 with f32 accumulation.
        y = jnp.dot(x_bf16, w_ref[...], preferred_element_type=jnp.float32)
        # BatchNorm1d (training mode): biased variance over the batch axis.
        mean = batch_mean(y)
        centered = y - mean
        var = batch_mean(centered * centered)
        y_bn = v[0:1, :] * (centered * jax.lax.rsqrt(var + _BN_EPS)) + v[1:2, :]
        # ReLU; hand the next MXU pass a bf16 operand (all stats math was f32).
        return jnp.maximum(y_bn, 0.0).astype(jnp.bfloat16)

    h = block(x.astype(jnp.bfloat16), w0_ref, v0_ref)
    h = block(h, w1_ref, v1_ref)
    h = block(h, w2_ref, v2_ref)
    h = block(h, w3_ref, v3_ref)

    # Final Linear + Sigmoid (exp runs on the EUP, in f32).
    y = jnp.dot(h, wf_ref[...], preferred_element_type=jnp.float32) + bf_ref[...]
    o_ref[...] = jax.nn.sigmoid(y)


def _vmem_spec():
    return pl.BlockSpec(memory_space=pltpu.MemorySpace.VMEM)


def _pad_lanes(a, multiple=_LANE):
    pad = (-a.shape[-1]) % multiple
    if pad == 0:
        return a
    return jnp.pad(a, [(0, 0)] * (a.ndim - 1) + [(0, pad)])


def init_generator_params(key, z_dim, im_dim, hidden_dim):
    """Parameter init mirroring the PyTorch module's shapes / uniform bounds."""
    dims = [z_dim, hidden_dim, hidden_dim * 2, hidden_dim * 4, hidden_dim * 8]
    keys = jax.random.split(key, 5)
    blocks = []
    for i in range(4):
        fan_in, fan_out = dims[i], dims[i + 1]
        bound = 1.0 / float(fan_in) ** 0.5
        w = jax.random.uniform(keys[i], (fan_in, fan_out), jnp.float32, -bound, bound)
        # NOTE: the block's Linear bias is intentionally NOT materialized --
        # training-mode BatchNorm's mean subtraction cancels it exactly.
        gamma = jnp.ones((1, fan_out), jnp.float32)
        beta = jnp.zeros((1, fan_out), jnp.float32)
        vecs = jnp.concatenate([gamma, beta], axis=0)          # (2, out)
        blocks.append((w.astype(jnp.bfloat16), vecs))
    # Final Linear(hidden_dim*8, im_dim) + Sigmoid; lane-pad the output dim to
    # a multiple of 128 so the kernel's output store is unmasked/lane-dense.
    fan_in = dims[-1]
    bound = 1.0 / float(fan_in) ** 0.5
    kw, kb = jax.random.split(keys[4])
    wf = jax.random.uniform(kw, (fan_in, im_dim), jnp.float32, -bound, bound)
    bf = jax.random.uniform(kb, (1, im_dim), jnp.float32, -bound, bound)
    wf = _pad_lanes(wf).astype(jnp.bfloat16)
    bf = _pad_lanes(bf)
    return {"blocks": blocks, "final": (wf, bf)}


@functools.partial(jax.jit, static_argnames=("im_dim",))
def generator_forward(noise, params, *, im_dim):
    n = noise.shape[0]
    wf, bf = params["final"]
    im_pad = wf.shape[1]

    flat_args = [noise]
    widths = []
    flops = 0
    for (w, vecs) in params["blocks"]:
        flat_args.extend([w, vecs])
        widths.append(w.shape[1])
        flops += 2 * n * w.shape[0] * w.shape[1]
    flat_args.extend([wf, bf])
    flops += 2 * n * wf.shape[0] * im_pad
    flops += 10 * n * (sum(widths) + im_pad)            # BN / ReLU / sigmoid elementwise
    transcendentals = n * im_pad + 4 * max(widths)      # sigmoid exp + BN rsqrt
    param_bytes = sum(int(a.size) * a.dtype.itemsize for a in flat_args[1:])
    act_bytes = 4 * n * (noise.shape[1] + sum(widths) + im_pad)
    bytes_accessed = int(noise.size) * 4 + param_bytes + n * im_pad * 4

    # Everything (params + full-batch activations) lives in VMEM; leave
    # headroom for Mosaic scratch and stay below v7x's 64 MiB physical VMEM.
    vmem_limit = int(min(max(4 * (param_bytes + act_bytes), 32 << 20), 56 << 20))
    # TODO(synk): batches whose activations exceed this cap need a batch-tiled
    # grid with a two-pass / accumulated GLOBAL BatchNorm-stats scheme.

    fwd = pl.pallas_call(
        _generator_kernel,
        out_shape=jax.ShapeDtypeStruct((n, im_pad), jnp.float32),
        in_specs=[_vmem_spec()] * len(flat_args),
        out_specs=_vmem_spec(),
        compiler_params=pltpu.CompilerParams(vmem_limit_bytes=vmem_limit),
        cost_estimate=pl.CostEstimate(
            flops=flops,
            transcendentals=transcendentals,
            bytes_accessed=bytes_accessed),
    )
    out_padded = fwd(*flat_args)
    return out_padded[:, :im_dim]


if __name__ == "__main__":
    # Small, deterministic demo shapes consistent with the module's forward
    # (n_samples, z_dim).  im_dim=784 (MNIST) exercises the 784->896 lane pad.
    batch = 64
    z_dim = 10
    hidden_dim = 32
    im_dim = 784

    key = jax.random.PRNGKey(0)
    k_noise, k_params = jax.random.split(key)
    noise = jax.random.normal(k_noise, (batch, z_dim), jnp.float32)
    params = init_generator_params(k_params, z_dim, im_dim, hidden_dim)

    out = generator_forward(noise, params, im_dim=im_dim)
    out = jax.block_until_ready(out)

    assert out.shape == (batch, im_dim), out.shape
    assert bool(jnp.all((out >= 0.0) & (out <= 1.0)))
    assert bool(jnp.all(jnp.isfinite(out)))
    print("KERNEL_OK")
</pallas_src>

<mosaic_0001>
module attributes {stable_mosaic.version = 11 : i64} {
  func.func @_generator_kernel(%arg0: memref<64x10xf32, #tpu.memory_space<vmem>>, %arg1: memref<10x32xbf16, #tpu.memory_space<vmem>>, %arg2: memref<2x32xf32, #tpu.memory_space<vmem>>, %arg3: memref<32x64xbf16, #tpu.memory_space<vmem>>, %arg4: memref<2x64xf32, #tpu.memory_space<vmem>>, %arg5: memref<64x128xbf16, #tpu.memory_space<vmem>>, %arg6: memref<2x128xf32, #tpu.memory_space<vmem>>, %arg7: memref<128x256xbf16, #tpu.memory_space<vmem>>, %arg8: memref<2x256xf32, #tpu.memory_space<vmem>>, %arg9: memref<256x896xbf16, #tpu.memory_space<vmem>>, %arg10: memref<1x896xf32, #tpu.memory_space<vmem>>, %arg11: memref<64x896xf32, #tpu.memory_space<vmem>>) attributes {dimension_semantics = [], scalar_prefetch = 0 : i64, scratch_operands = 0 : i64, tpu.core_type = #tpu.core_type<tc>} {
    %c0 = arith.constant 0 : index
    %c0_0 = arith.constant 0 : index
    %0 = vector.load %arg0[%c0, %c0_0] : memref<64x10xf32, #tpu.memory_space<vmem>>, vector<64x10xf32>
    %1 = arith.truncf %0 : vector<64x10xf32> to vector<64x10xbf16>
    %c0_1 = arith.constant 0 : index
    %c0_2 = arith.constant 0 : index
    %2 = vector.load %arg2[%c0_1, %c0_2] : memref<2x32xf32, #tpu.memory_space<vmem>>, vector<2x32xf32>
    %c0_3 = arith.constant 0 : index
    %c0_4 = arith.constant 0 : index
    %3 = vector.load %arg1[%c0_3, %c0_4] : memref<10x32xbf16, #tpu.memory_space<vmem>>, vector<10x32xbf16>
    %cst = arith.constant dense<0.000000e+00> : vector<64x32xf32>
    %4 = tpu.matmul %1, %3, %cst {dimension_numbers = #tpu.dot_dimension_numbers<[1], [0], [0], [1], [0, 0, 1, 1], [], []>} : vector<64x10xbf16>, vector<10x32xbf16>, vector<64x32xf32> -> vector<64x32xf32>
    %cst_5 = arith.constant dense<0.000000e+00> : vector<32xf32>
    %5 = vector.multi_reduction <add>, %4, %cst_5 [0] : vector<64x32xf32> to vector<32xf32>
    %6 = vector.shape_cast %5 : vector<32xf32> to vector<1x32xf32>
    %cst_6 = arith.constant 6.400000e+01 : f32
    %7 = vector.broadcast %cst_6 : f32 to vector<1x32xf32>
    %8 = arith.divf %6, %7 : vector<1x32xf32>
    %9 = vector.broadcast %8 : vector<1x32xf32> to vector<64x32xf32>
    %10 = arith.subf %4, %9 : vector<64x32xf32>
    %11 = arith.mulf %10, %10 : vector<64x32xf32>
    %cst_7 = arith.constant dense<0.000000e+00> : vector<32xf32>
    %12 = vector.multi_reduction <add>, %11, %cst_7 [0] : vector<64x32xf32> to vector<32xf32>
    %13 = vector.shape_cast %12 : vector<32xf32> to vector<1x32xf32>
    %cst_8 = arith.constant 6.400000e+01 : f32
    %14 = vector.broadcast %cst_8 : f32 to vector<1x32xf32>
    %15 = arith.divf %13, %14 : vector<1x32xf32>
    %16 = vector.extract_strided_slice %2 {offsets = [0, 0], sizes = [1, 32], strides = [1, 1]} : vector<2x32xf32> to vector<1x32xf32>
    %cst_9 = arith.constant 9.99999974E-6 : f32
    %17 = vector.broadcast %cst_9 : f32 to vector<1x32xf32>
    %18 = arith.addf %15, %17 : vector<1x32xf32>
    %19 = math.rsqrt %18 : vector<1x32xf32>
    %20 = vector.broadcast %19 : vector<1x32xf32> to vector<64x32xf32>
    %21 = arith.mulf %10, %20 : vector<64x32xf32>
    %22 = vector.broadcast %16 : vector<1x32xf32> to vector<64x32xf32>
    %23 = arith.mulf %22, %21 : vector<64x32xf32>
    %24 = vector.extract_strided_slice %2 {offsets = [1, 0], sizes = [1, 32], strides = [1, 1]} : vector<2x32xf32> to vector<1x32xf32>
    %25 = vector.broadcast %24 : vector<1x32xf32> to vector<64x32xf32>
    %26 = arith.addf %23, %25 : vector<64x32xf32>
    %cst_10 = arith.constant 0.000000e+00 : f32
    %27 = vector.broadcast %cst_10 : f32 to vector<64x32xf32>
    %28 = arith.maximumf %26, %27 : vector<64x32xf32>
    %29 = arith.truncf %28 : vector<64x32xf32> to vector<64x32xbf16>
    %c0_11 = arith.constant 0 : index
    %c0_12 = arith.constant 0 : index
    %30 = vector.load %arg4[%c0_11, %c0_12] : memref<2x64xf32, #tpu.memory_space<vmem>>, vector<2x64xf32>
    %c0_13 = arith.constant 0 : index
    %c0_14 = arith.constant 0 : index
    %31 = vector.load %arg3[%c0_13, %c0_14] : memref<32x64xbf16, #tpu.memory_space<vmem>>, vector<32x64xbf16>
    %cst_15 = arith.constant dense<0.000000e+00> : vector<64x64xf32>
    %32 = tpu.matmul %29, %31, %cst_15 {dimension_numbers = #tpu.dot_dimension_numbers<[1], [0], [0], [1], [0, 0, 1, 1], [], []>} : vector<64x32xbf16>, vector<32x64xbf16>, vector<64x64xf32> -> vector<64x64xf32>
    %cst_16 = arith.constant dense<0.000000e+00> : vector<64xf32>
    %33 = vector.multi_reduction <add>, %32, %cst_16 [0] : vector<64x64xf32> to vector<64xf32>
    %34 = vector.shape_cast %33 : vector<64xf32> to vector<1x64xf32>
    %cst_17 = arith.constant 6.400000e+01 : f32
    %35 = vector.broadcast %cst_17 : f32 to vector<1x64xf32>
    %36 = arith.divf %34, %35 : vector<1x64xf32>
    %37 = vector.broadcast %36 : vector<1x64xf32> to vector<64x64xf32>
    %38 = arith.subf %32, %37 : vector<64x64xf32>
    %39 = arith.mulf %38, %38 : vector<64x64xf32>
    %cst_18 = arith.constant dense<0.000000e+00> : vector<64xf32>
    %40 = vector.multi_reduction <add>, %39, %cst_18 [0] : vector<64x64xf32> to vector<64xf32>
    %41 = vector.shape_cast %40 : vector<64xf32> to vector<1x64xf32>
    %cst_19 = arith.constant 6.400000e+01 : f32
    %42 = vector.broadcast %cst_19 : f32 to vector<1x64xf32>
    %43 = arith.divf %41, %42 : vector<1x64xf32>
    %44 = vector.extract_strided_slice %30 {offsets = [0, 0], sizes = [1, 64], strides = [1, 1]} : vector<2x64xf32> to vector<1x64xf32>
    %cst_20 = arith.constant 9.99999974E-6 : f32
    %45 = vector.broadcast %cst_20 : f32 to vector<1x64xf32>
    %46 = arith.addf %43, %45 : vector<1x64xf32>
    %47 = math.rsqrt %46 : vector<1x64xf32>
    %48 = vector.broadcast %47 : vector<1x64xf32> to vector<64x64xf32>
    %49 = arith.mulf %38, %48 : vector<64x64xf32>
    %50 = vector.broadcast %44 : vector<1x64xf32> to vector<64x64xf32>
    %51 = arith.mulf %50, %49 : vector<64x64xf32>
    %52 = vector.extract_strided_slice %30 {offsets = [1, 0], sizes = [1, 64], strides = [1, 1]} : vector<2x64xf32> to vector<1x64xf32>
    %53 = vector.broadcast %52 : vector<1x64xf32> to vector<64x64xf32>
    %54 = arith.addf %51, %53 : vector<64x64xf32>
    %cst_21 = arith.constant 0.000000e+00 : f32
    %55 = vector.broadcast %cst_21 : f32 to vector<64x64xf32>
    %56 = arith.maximumf %54, %55 : vector<64x64xf32>
    %57 = arith.truncf %56 : vector<64x64xf32> to vector<64x64xbf16>
    %c0_22 = arith.constant 0 : index
    %c0_23 = arith.constant 0 : index
    %58 = vector.load %arg6[%c0_22, %c0_23] : memref<2x128xf32, #tpu.memory_space<vmem>>, vector<2x128xf32>
    %c0_24 = arith.constant 0 : index
    %c0_25 = arith.constant 0 : index
    %59 = vector.load %arg5[%c0_24, %c0_25] : memref<64x128xbf16, #tpu.memory_space<vmem>>, vector<64x128xbf16>
    %cst_26 = arith.constant dense<0.000000e+00> : vector<64x128xf32>
    %60 = tpu.matmul %57, %59, %cst_26 {dimension_numbers = #tpu.dot_dimension_numbers<[1], [0], [0], [1], [0, 0, 1, 1], [], []>} : vector<64x64xbf16>, vector<64x128xbf16>, vector<64x128xf32> -> vector<64x128xf32>
    %cst_27 = arith.constant dense<0.000000e+00> : vector<128xf32>
    %61 = vector.multi_reduction <add>, %60, %cst_27 [0] : vector<64x128xf32> to vector<128xf32>
    %62 = vector.shape_cast %61 : vector<128xf32> to vector<1x128xf32>
    %cst_28 = arith.constant 6.400000e+01 : f32
    %63 = vector.broadcast %cst_28 : f32 to vector<1x128xf32>
    %64 = arith.divf %62, %63 : vector<1x128xf32>
    %65 = vector.broadcast %64 : vector<1x128xf32> to vector<64x128xf32>
    %66 = arith.subf %60, %65 : vector<64x128xf32>
    %67 = arith.mulf %66, %66 : vector<64x128xf32>
    %cst_29 = arith.constant dense<0.000000e+00> : vector<128xf32>
    %68 = vector.multi_reduction <add>, %67, %cst_29 [0] : vector<64x128xf32> to vector<128xf32>
    %69 = vector.shape_cast %68 : vector<128xf32> to vector<1x128xf32>
    %cst_30 = arith.constant 6.400000e+01 : f32
    %70 = vector.broadcast %cst_30 : f32 to vector<1x128xf32>
    %71 = arith.divf %69, %70 : vector<1x128xf32>
    %72 = vector.extract_strided_slice %58 {offsets = [0, 0], sizes = [1, 128], strides = [1, 1]} : vector<2x128xf32> to vector<1x128xf32>
    %cst_31 = arith.constant 9.99999974E-6 : f32
    %73 = vector.broadcast %cst_31 : f32 to vector<1x128xf32>
    %74 = arith.addf %71, %73 : vector<1x128xf32>
    %75 = math.rsqrt %74 : vector<1x128xf32>
    %76 = vector.broadcast %75 : vector<1x128xf32> to vector<64x128xf32>
    %77 = arith.mulf %66, %76 : vector<64x128xf32>
    %78 = vector.broadcast %72 : vector<1x128xf32> to vector<64x128xf32>
    %79 = arith.mulf %78, %77 : vector<64x128xf32>
    %80 = vector.extract_strided_slice %58 {offsets = [1, 0], sizes = [1, 128], strides = [1, 1]} : vector<2x128xf32> to vector<1x128xf32>
    %81 = vector.broadcast %80 : vector<1x128xf32> to vector<64x128xf32>
    %82 = arith.addf %79, %81 : vector<64x128xf32>
    %cst_32 = arith.constant 0.000000e+00 : f32
    %83 = vector.broadcast %cst_32 : f32 to vector<64x128xf32>
    %84 = arith.maximumf %82, %83 : vector<64x128xf32>
    %85 = arith.truncf %84 : vector<64x128xf32> to vector<64x128xbf16>
    %c0_33 = arith.constant 0 : index
    %c0_34 = arith.constant 0 : index
    %86 = vector.load %arg8[%c0_33, %c0_34] : memref<2x256xf32, #tpu.memory_space<vmem>>, vector<2x256xf32>
    %c0_35 = arith.constant 0 : index
    %c0_36 = arith.constant 0 : index
    %87 = vector.load %arg7[%c0_35, %c0_36] : memref<128x256xbf16, #tpu.memory_space<vmem>>, vector<128x256xbf16>
    %cst_37 = arith.constant dense<0.000000e+00> : vector<64x256xf32>
    %88 = tpu.matmul %85, %87, %cst_37 {dimension_numbers = #tpu.dot_dimension_numbers<[1], [0], [0], [1], [0, 0, 1, 1], [], []>} : vector<64x128xbf16>, vector<128x256xbf16>, vector<64x256xf32> -> vector<64x256xf32>
    %cst_38 = arith.constant dense<0.000000e+00> : vector<256xf32>
    %89 = vector.multi_reduction <add>, %88, %cst_38 [0] : vector<64x256xf32> to vector<256xf32>
    %90 = vector.shape_cast %89 : vector<256xf32> to vector<1x256xf32>
    %cst_39 = arith.constant 6.400000e+01 : f32
    %91 = vector.broadcast %cst_39 : f32 to vector<1x256xf32>
    %92 = arith.divf %90, %91 : vector<1x256xf32>
    %93 = vector.broadcast %92 : vector<1x256xf32> to vector<64x256xf32>
    %94 = arith.subf %88, %93 : vector<64x256xf32>
    %95 = arith.mulf %94, %94 : vector<64x256xf32>
    %cst_40 = arith.constant dense<0.000000e+00> : vector<256xf32>
    %96 = vector.multi_reduction <add>, %95, %cst_40 [0] : vector<64x256xf32> to vector<256xf32>
    %97 = vector.shape_cast %96 : vector<256xf32> to vector<1x256xf32>
    %cst_41 = arith.constant 6.400000e+01 : f32
    %98 = vector.broadcast %cst_41 : f32 to vector<1x256xf32>
    %99 = arith.divf %97, %98 : vector<1x256xf32>
    %100 = vector.extract_strided_slice %86 {offsets = [0, 0], sizes = [1, 256], strides = [1, 1]} : vector<2x256xf32> to vector<1x256xf32>
    %cst_42 = arith.constant 9.99999974E-6 : f32
    %101 = vector.broadcast %cst_42 : f32 to vector<1x256xf32>
    %102 = arith.addf %99, %101 : vector<1x256xf32>
    %103 = math.rsqrt %102 : vector<1x256xf32>
    %104 = vector.broadcast %103 : vector<1x256xf32> to vector<64x256xf32>
    %105 = arith.mulf %94, %104 : vector<64x256xf32>
    %106 = vector.broadcast %100 : vector<1x256xf32> to vector<64x256xf32>
    %107 = arith.mulf %106, %105 : vector<64x256xf32>
    %108 = vector.extract_strided_slice %86 {offsets = [1, 0], sizes = [1, 256], strides = [1, 1]} : vector<2x256xf32> to vector<1x256xf32>
    %109 = vector.broadcast %108 : vector<1x256xf32> to vector<64x256xf32>
    %110 = arith.addf %107, %109 : vector<64x256xf32>
    %cst_43 = arith.constant 0.000000e+00 : f32
    %111 = vector.broadcast %cst_43 : f32 to vector<64x256xf32>
    %112 = arith.maximumf %110, %111 : vector<64x256xf32>
    %113 = arith.truncf %112 : vector<64x256xf32> to vector<64x256xbf16>
    %c0_44 = arith.constant 0 : index
    %c0_45 = arith.constant 0 : index
    %114 = vector.load %arg9[%c0_44, %c0_45] : memref<256x896xbf16, #tpu.memory_space<vmem>>, vector<256x896xbf16>
    %cst_46 = arith.constant dense<0.000000e+00> : vector<64x896xf32>
    %115 = tpu.matmul %113, %114, %cst_46 {dimension_numbers = #tpu.dot_dimension_numbers<[1], [0], [0], [1], [0, 0, 1, 1], [], []>} : vector<64x256xbf16>, vector<256x896xbf16>, vector<64x896xf32> -> vector<64x896xf32>
    %c0_47 = arith.constant 0 : index
    %c0_48 = arith.constant 0 : index
    %116 = vector.load %arg10[%c0_47, %c0_48] : memref<1x896xf32, #tpu.memory_space<vmem>>, vector<1x896xf32>
    %117 = vector.broadcast %116 : vector<1x896xf32> to vector<64x896xf32>
    %118 = arith.addf %115, %117 : vector<64x896xf32>
    %119 = arith.negf %118 : vector<64x896xf32>
    %120 = math.exp %119 : vector<64x896xf32>
    %cst_49 = arith.constant 1.000000e+00 : f32
    %121 = vector.broadcast %cst_49 : f32 to vector<64x896xf32>
    %122 = arith.addf %121, %120 : vector<64x896xf32>
    %123 = arith.divf %121, %122 : vector<64x896xf32>
    %c0_50 = arith.constant 0 : index
    %c0_51 = arith.constant 0 : index
    %124 = vector.load %arg11[%c0_50, %c0_51] : memref<64x896xf32, #tpu.memory_space<vmem>>, vector<64x896xf32>
    tpu.vector_store %arg11[%c0_50, %c0_51], %123 {strides = array<i32>} : memref<64x896xf32, #tpu.memory_space<vmem>>, vector<64x896xf32>,
    return
  }
}

</mosaic_0001>

<llo_original>
// kernel: generator_forward.1
$region0: #{generator_forward.1}
  #allocation0 [shape = 'u32[]', space=smem, size = 0x4, offset = 0x4, fixed_abs, tag = 'smem constant byte address 0x4 - core index']
  #allocation1 [shape = 'u32[144,128]{1,0:T(1,128)}', space=vmem, size = 0x12000, scoped, tag = 'internal scratch']
  %s0 = inlined_call_operand.vmem [shape: f32[64,10], index: 0, kind: input, shape index: {}]
  %s1 = inlined_call_operand.vmem [shape: bf16[10,32], index: 1, kind: input, shape index: {}]
  %s2 = inlined_call_operand.vmem [shape: f32[2,32], index: 2, kind: input, shape index: {}]
  %s3 = inlined_call_operand.vmem [shape: bf16[32,64], index: 3, kind: input, shape index: {}]
  %s4 = inlined_call_operand.vmem [shape: f32[2,64], index: 4, kind: input, shape index: {}]
  %s5 = inlined_call_operand.vmem [shape: bf16[64,128], index: 5, kind: input, shape index: {}]
  %s6 = inlined_call_operand.vmem [shape: f32[2,128], index: 6, kind: input, shape index: {}]
  %s7 = inlined_call_operand.hbm [shape: bf16[128,256], index: 7, kind: input, shape index: {}]
  %s8 = inlined_call_operand.vmem [shape: f32[2,256], index: 8, kind: input, shape index: {}]
  %s9 = inlined_call_operand.hbm [shape: bf16[256,896], index: 9, kind: input, shape index: {}]
  %s10 = inlined_call_operand.vmem [shape: f32[1,896], index: 10, kind: input, shape index: {}]
  %s11 = inlined_call_operand.hbm [shape: f32[64,896], index: 11, kind: output, shape index: {}]
  %s12 = sld [smem:[#allocation0]]
  $region62: #{generator_forward.1} parent=0
    _
  %s14 = ssub.s32 1, %s12
  %s15 = scalar_select 0, %s14, %s12
  $region1: #{generator_forward.1} parent=0
    #allocation2 [shape = 'u8[65536]{0}', space=vmem, size = 0x10000, scoped, tag = 'input window, operand 7, single buffered']
    #allocation3 [shape = 's32[1]{0}', space=sflag, size = 0x4, scoped, tag = 'scoped memory for generator_forward.1']
    #allocation4 [shape = 's32[1]{0}', space=sflag, size = 0x4, scoped, tag = 'scoped memory for generator_forward.1']
    #allocation5 [shape = 'u8[458752]{0}', space=vmem, size = 0x70000, scoped, tag = 'input window, operand 9, single buffered']
    #allocation6 [shape = 's32[1]{0}', space=sflag, size = 0x4, scoped, tag = 'scoped memory for generator_forward.1']
    #allocation7 [shape = 'u8[229376]{0}', space=vmem, size = 0x38000, scoped, tag = 'output window, operand 0, single buffered']
    %16 = vsyncpa [#allocation3], 0
    %17 = vsyncpa [#allocation6], 0
    %18 = vsyncpa [#allocation4], 0
    // Predicated region
    $region2: #{generator_forward.1} parent=1 // pred_check
      _
    $region3: #{generator_forward.1} parent=1 // pred_check_branch
      %20 = sbr.rel (0) target = $region5
    $region4: #{generator_forward.1} parent=1 // pred_region
      _
    $region5: #{generator_forward.1} parent=1 // pred_fallthru
      _
    // Predicated region
    $region6: #{generator_forward.1} parent=1 // pred_check
      _
    $region7: #{generator_forward.1} parent=1 // pred_check_branch
      %22 = sbr.rel (0) target = $region9
    $region8: #{generator_forward.1} parent=1 // pred_region
      _
    $region9: #{generator_forward.1} parent=1 // pred_fallthru
      _
    // Predicated region
    $region10: #{generator_forward.1} parent=1 // pred_check
      _
    $region11: #{generator_forward.1} parent=1 // pred_check_branch
      %24 = sbr.rel (0) target = $region13
    $region12: #{generator_forward.1} parent=1 // pred_region
      _
    $region13: #{generator_forward.1} parent=1 // pred_fallthru
      _
    // Predicated region
    $region14: #{generator_forward.1} parent=1 // pred_check
      _
    $region15: #{generator_forward.1} parent=1 // pred_check_branch
      %26 = sbr.rel (0) target = $region17
    $region16: #{generator_forward.1} parent=1 // pred_region
      _
    $region17: #{generator_forward.1} parent=1 // pred_fallthru
      _
    // Predicated region
    $region18: #{generator_forward.1} parent=1 // pred_check
      _
    $region19: #{generator_forward.1} parent=1 // pred_check_branch
      %28 = sbr.rel (0) target = $region21
    $region20: #{generator_forward.1} parent=1 // pred_region
      _
    $region21: #{generator_forward.1} parent=1 // pred_fallthru
      _
    // Predicated region
    $region22: #{generator_forward.1} parent=1 // pred_check
      _
    $region23: #{generator_forward.1} parent=1 // pred_check_branch
      %30 = sbr.rel (0) target = $region25
    $region24: #{generator_forward.1} parent=1 // pred_region
      _
    $region25: #{generator_forward.1} parent=1 // pred_fallthru
      _
    // Predicated region
    $region26: #{generator_forward.1} parent=1 // pred_check
      _
    $region27: #{generator_forward.1} parent=1 // pred_check_branch
      %32 = sbr.rel (0) target = $region29
    $region28: #{generator_forward.1} parent=1 // pred_region
      _
    $region29: #{generator_forward.1} parent=1 // pred_fallthru
      _
    // Predicated region
    $region30: #{generator_forward.1} parent=1 // pred_check
      _
    $region31: #{generator_forward.1} parent=1 // pred_check_branch
      %34 = sbr.rel (0) target = $region33
    $region32: #{generator_forward.1} parent=1 // pred_region
      %s36 = ssub.s32 2048, 2048
      %37 = vsyncadd [#allocation3], %s36
      %s38 = sshll.u32 [#allocation2], 4
      %s39 = int_to_ptr.vmem [resolvable:$true] %s38
      %44 = dma.hbm_to_vmem [thread:$0]  %s7, 2048, %s39, [#allocation3], 128, 128, 8
    $region33: #{generator_forward.1} parent=1 // pred_fallthru
      _
    // Predicated region
    $region34: #{generator_forward.1} parent=1 // pred_check
      _
    $region35: #{generator_forward.1} parent=1 // pred_check_branch
      %46 = sbr.rel (0) target = $region37
    $region36: #{generator_forward.1} parent=1 // pred_region
      _
    $region37: #{generator_forward.1} parent=1 // pred_fallthru
      _
    // Predicated region
    $region38: #{generator_forward.1} parent=1 // pred_check
      _
    $region39: #{generator_forward.1} parent=1 // pred_check_branch
      %48 = sbr.rel (0) target = $region41
    $region40: #{generator_forward.1} parent=1 // pred_region
      %s50 = ssub.s32 14336, 14336
      %51 = vsyncadd [#allocation6], %s50
      %s52 = sshll.u32 [#allocation5], 4
      %s53 = int_to_ptr.vmem [resolvable:$true] %s52
      %58 = dma.hbm_to_vmem [thread:$0]  %s9, 14336, %s53, [#allocation6], 448, 448, 28
    $region41: #{generator_forward.1} parent=1 // pred_fallthru
      _
    // Predicated region
    $region42: #{generator_forward.1} parent=1 // pred_check
      _
    $region43: #{generator_forward.1} parent=1 // pred_check_branch
      %60 = sbr.rel (0) target = $region45
    $region44: #{generator_forward.1} parent=1 // pred_region
      _
    $region45: #{generator_forward.1} parent=1 // pred_fallthru
      _
    // Predicated region
    $region46: #{generator_forward.1} parent=1 // pred_check
      _
    $region47: #{generator_forward.1} parent=1 // pred_check_branch
      %62 = sbr.rel (0) target = $region49
    $region48: #{generator_forward.1} parent=1 // pred_region
      %63 = dma.done [#allocation3], 2048
    $region49: #{generator_forward.1} parent=1 // pred_fallthru
      _
    // Predicated region
    $region50: #{generator_forward.1} parent=1 // pred_check
      _
    $region51: #{generator_forward.1} parent=1 // pred_check_branch
      %65 = sbr.rel (0) target = $region53
    $region52: #{generator_forward.1} parent=1 // pred_region
      %66 = dma.done [#allocation6], 14336
    $region53: #{generator_forward.1} parent=1 // pred_fallthru
      _
    %v68 = vld [vmem:[%s0] sm:$0xff]
    %v69 = vld [vmem:[%s0 + $0x8] sm:$0xff]
    %v70 = vld [vmem:[%s0 + $0x10] sm:$0xff]
    %v71 = vld [vmem:[%s0 + $0x18] sm:$0xff]
    %v72 = vld [vmem:[%s0 + $0x20] sm:$0xff]
    %v73 = vld [vmem:[%s0 + $0x28] sm:$0xff]
    %v74 = vld [vmem:[%s0 + $0x30] sm:$0xff]
    %v75 = vld [vmem:[%s0 + $0x38] sm:$0xff]
    %v76 = vpack.c.bf16 %v69, %v68
    %v77 = vpack.c.bf16 %v71, %v70
    %v78 = vpack.c.bf16 %v73, %v72
    %v79 = vpack.c.bf16 %v75, %v74
    %v80 = vld [vmem:[%s2] sm:$0x3]
    %v81 = vld [vmem:[%s1] sm:$0xf]
    %v82 = vld [vmem:[%s1 + $0x4] sm:$0x1]
    %v85 = vunpack.c.l.b16 %v81
    %v86 = vunpack.c.l.b16 %v82
    %v87 = vpack.c.b16 %v86, %v85
    %vm88 = vcmask 80896
    %v90 = vsel %vm88, %v76, 0
    %v93 = vsel %vm88, %v77, 0
    %v96 = vsel %vm88, %v78, 0
    %v99 = vsel %vm88, %v79, 0
    %vm101 = vcmask 1044480
    %v103 = vsel %vm101, %v87, 0
    %105 = vmatprep.subr.bf16.mxu0 0
    %106 = vmatpush1.bf16.msra.mxu0 %v103
    %107 = vmatprep.subr.bf16.mxu0 0
    %108 = vmatpush1.bf16.msra.mxu0 0
    %109 = vmatprep.subr.bf16.mxu0 0
    %110 = vmatpush1.bf16.msra.mxu0 0
    %111 = vmatprep.subr.bf16.mxu0 0
    %112 = vmatpush1.bf16.msra.mxu0 0
    %113 = vmatprep.subr.bf16.mxu0 0
    %114 = vmatpush1.bf16.msra.mxu0 0
    %115 = vmatprep.subr.bf16.mxu0 0
    %116 = vmatpush1.bf16.msra.mxu0 0
    %117 = vmatprep.subr.bf16.mxu0 0
    %118 = vmatpush1.bf16.msra.mxu0 0
    %119 = vmatprep.subr.bf16.mxu0 0
    %120 = vmatpush1.bf16.msra.mxu0 0
    %121 = vmatprep.subr.bf16.mxu0 0
    %122 = vmatpush1.bf16.msra.mxu0 0
    %123 = vmatprep.subr.bf16.mxu0 0
    %124 = vmatpush1.bf16.msra.mxu0 0
    %125 = vmatprep.subr.bf16.mxu0 0
    %126 = vmatpush1.bf16.msra.mxu0 0
    %127 = vmatprep.subr.bf16.mxu0 0
    %128 = vmatpush1.bf16.msra.mxu0 0
    %129 = vmatprep.subr.bf16.mxu0 0
    %130 = vmatpush1.bf16.msra.mxu0 0
    %131 = vmatprep.subr.bf16.mxu0 0
    %132 = vmatpush1.bf16.msra.mxu0 0
    %133 = vmatprep.subr.bf16.mxu0 0
    %134 = vmatpush1.bf16.msra.mxu0 0
    %135 = vmatprep.subr.bf16.mxu0 0
    %136 = vmatpush1.bf16.msra.mxu0 0
    %137 = vmatprep.mubr.bf16.mxu0 0
    %138 = vmatmul.mubr.bf16.gmra.mrb[0].mxu0 %v90
    %v139 = vpop.f32.mrb[0].mxu0
    %v140 = vadd.f32 0.0, %v139
    %v141 = vpop.f32.mrb[0].mxu0
    %v142 = vpop.f32.mrb[0].mxu0
    %v143 = vadd.f32 0.0, %v142
    %v144 = vpop.f32.mrb[0].mxu0
    %145 = vmatprep.mubr.bf16.mxu0 0
    %146 = vmatmul.mubr.bf16.gmra.mrb[0].mxu0 %v93
    %v147 = vpop.f32.mrb[0].mxu0
    %v148 = vadd.f32 0.0, %v147
    %v149 = vpop.f32.mrb[0].mxu0
    %v150 = vpop.f32.mrb[0].mxu0
    %v151 = vadd.f32 0.0, %v150
    %v152 = vpop.f32.mrb[0].mxu0
    %153 = vmatprep.mubr.bf16.mxu0 0
    %154 = vmatmul.mubr.bf16.gmra.mrb[0].mxu0 %v96
    %v155 = vpop.f32.mrb[0].mxu0
    %v156 = vadd.f32 0.0, %v155
    %v157 = vpop.f32.mrb[0].mxu0
    %v158 = vpop.f32.mrb[0].mxu0
    %v159 = vadd.f32 0.0, %v158
    %v160 = vpop.f32.mrb[0].mxu0
    %161 = vmatprep.mubr.bf16.mxu0 0
    %162 = vmatmul.mubr.bf16.gmra.mrb[0].mxu0 %v99
    %v163 = vpop.f32.mrb[0].mxu0
    %v164 = vadd.f32 0.0, %v163
    %v165 = vpop.f32.mrb[0].mxu0
    %v166 = vpop.f32.mrb[0].mxu0
    %v167 = vadd.f32 0.0, %v166
    %v168 = vpop.f32.mrb[0].mxu0
    %169 = vdwg.mxu0
    %vm170 = vcmask 261120
    %v171 = vsel %vm170, %v140, 0.0
    %v172 = vsel %vm170, %v143, 0.0
    %v173 = vadd.f32 %v171, %v172
    %v174 = vsel %vm170, %v148, 0.0
    %v175 = vadd.f32 %v173, %v174
    %v176 = vsel %vm170, %v151, 0.0
    %v177 = vadd.f32 %v175, %v176
    %v178 = vsel %vm170, %v156, 0.0
    %v179 = vadd.f32 %v177, %v178
    %v180 = vsel %vm170, %v159, 0.0
    %v181 = vadd.f32 %v179, %v180
    %v182 = vsel %vm170, %v164, 0.0
    %v183 = vadd.f32 %v181, %v182
    %v184 = vsel %vm170, %v167, 0.0
    %v185 = vadd.f32 %v183, %v184
    %v186 = vrot.slane %v185, 4
    %v187 = vadd.f32 %v185, %v186
    %v188 = vrot.slane %v187, 2
    %v189 = vadd.f32 %v187, %v188
    %v190 = vrot.slane %v189, 1
    %v191 = vadd.f32 %v189, %v190
    %v192 = vrcp.pop 64.0
    %v193 = vmul.f32 %v191, %v192
    %v194 = vsub.f32 %v140, %v193
    %v195 = vsub.f32 %v143, %v193
    %v196 = vsub.f32 %v148, %v193
    %v197 = vsub.f32 %v151, %v193
    %v198 = vsub.f32 %v156, %v193
    %v199 = vsub.f32 %v159, %v193
    %v200 = vsub.f32 %v164, %v193
    %v201 = vsub.f32 %v167, %v193
    %v202 = vmul.f32 %v194, %v194
    %v203 = vmul.f32 %v195, %v195
    %v204 = vmul.f32 %v196, %v196
    %v205 = vmul.f32 %v197, %v197
    %v206 = vmul.f32 %v198, %v198
    %v207 = vmul.f32 %v199, %v199
    %v208 = vmul.f32 %v200, %v200
    %v209 = vmul.f32 %v201, %v201
    %v210 = vsel %vm170, %v202, 0.0
    %v211 = vsel %vm170, %v203, 0.0
    %v212 = vadd.f32 %v210, %v211
    %v213 = vsel %vm170, %v204, 0.0
    %v214 = vadd.f32 %v212, %v213
    %v215 = vsel %vm170, %v205, 0.0
    %v216 = vadd.f32 %v214, %v215
    %v217 = vsel %vm170, %v206, 0.0
    %v218 = vadd.f32 %v216, %v217
    %v219 = vsel %vm170, %v207, 0.0
    %v220 = vadd.f32 %v218, %v219
    %v221 = vsel %vm170, %v208, 0.0
    %v222 = vadd.f32 %v220, %v221
    %v223 = vsel %vm170, %v209, 0.0
    %v224 = vadd.f32 %v222, %v223
    %v225 = vrot.slane %v224, 4
    %v226 = vadd.f32 %v224, %v225
    %v227 = vrot.slane %v226, 2
    %v228 = vadd.f32 %v226, %v227
    %v229 = vrot.slane %v228, 1
    %v230 = vadd.f32 %v228, %v229
    %v231 = vmul.f32 %v230, %v192
    %v232 = vadd.f32 %v231, 1e-05
    %v233 = vrsqrt.pop %v232
    %v234 = vmul.f32 %v194, %v233
    %v235 = vmul.f32 %v195, %v233
    %v236 = vmul.f32 %v196, %v233
    %v237 = vmul.f32 %v197, %v233
    %v238 = vmul.f32 %v198, %v233
    %v239 = vmul.f32 %v199, %v233
    %v240 = vmul.f32 %v200, %v233
    %v241 = vmul.f32 %v201, %v233
    %v242 = vlaneseq
    %v243 = vshrl.u32 %v242, 7
    %v244 = vsub.s32 0, %v243
    %v245 = vrot.slane %v80, %v244
    %v246 = vmul.f32 %v245, %v234
    %v247 = vmul.f32 %v245, %v235
    %v248 = vmul.f32 %v245, %v236
    %v249 = vmul.f32 %v245, %v237
    %v250 = vmul.f32 %v245, %v238
    %v251 = vmul.f32 %v245, %v239
    %v252 = vmul.f32 %v245, %v240
    %v253 = vmul.f32 %v245, %v241
    %v254 = vlaneseq
    %v255 = vshrl.u32 %v254, 7
    %v256 = vsub.s32 1, %v255
    %v257 = vrot.slane %v80, %v256
    %v258 = vadd.f32 %v246, %v257
    %v259 = vadd.f32 %v247, %v257
    %v260 = vadd.f32 %v248, %v257
    %v261 = vadd.f32 %v249, %v257
    %v262 = vadd.f32 %v250, %v257
    %v263 = vadd.f32 %v251, %v257
    %v264 = vadd.f32 %v252, %v257
    %v265 = vadd.f32 %v253, %v257
    %v266 = vmax.f32 %v258, 0.0
    %v267 = vmax.f32 %v259, 0.0
    %v268 = vmax.f32 %v260, 0.0
    %v269 = vmax.f32 %v261, 0.0
    %v270 = vmax.f32 %v262, 0.0
    %v271 = vmax.f32 %v263, 0.0
    %v272 = vmax.f32 %v264, 0.0
    %v273 = vmax.f32 %v265, 0.0
    %v274 = vpack.c.bf16 %v267, %v266
    %v275 = vpack.c.bf16 %v269, %v268
    %v276 = vpack.c.bf16 %v271, %v270
    %v277 = vpack.c.bf16 %v273, %v272
    %v278 = vld [vmem:[%s4] sm:$0x3]
    %v279 = vld [vmem:[%s3] sm:$0xf]
    %v280 = vld [vmem:[%s3 + $0x4] sm:$0xf]
    %v281 = vld [vmem:[%s3 + $0x8] sm:$0xf]
    %v282 = vld [vmem:[%s3 + $0xc] sm:$0xf]
    %v287 = vunpack.c.l.b16 %v279
    %v288 = vunpack.c.l.b16 %v280
    %v289 = vunpack.c.l.b16 %v281
    %v290 = vunpack.c.l.b16 %v282
    %v291 = vpack.c.b16 %v288, %v287
    %v292 = vpack.c.b16 %v290, %v289
    %v296 = vsel %vm170, %v274, 0
    %v299 = vsel %vm170, %v275, 0
    %v302 = vsel %vm170, %v276, 0
    %v305 = vsel %vm170, %v277, 0
    %307 = vmatprep.subr.bf16.mxu0 0
    %308 = vmatpush1.bf16.msra.mxu0 %v291
    %309 = vmatprep.subr.bf16.mxu0 0
    %310 = vmatpush1.bf16.msra.mxu0 %v292
    %311 = vmatprep.subr.bf16.mxu0 0
    %312 = vmatpush1.bf16.msra.mxu0 0
    %313 = vmatprep.subr.bf16.mxu0 0
    %314 = vmatpush1.bf16.msra.mxu0 0
    %315 = vmatprep.subr.bf16.mxu0 0
    %316 = vmatpush1.bf16.msra.mxu0 0
    %317 = vmatprep.subr.bf16.mxu0 0
    %318 = vmatpush1.bf16.msra.mxu0 0
    %319 = vmatprep.subr.bf16.mxu0 0
    %320 = vmatpush1.bf16.msra.mxu0 0
    %321 = vmatprep.subr.bf16.mxu0 0
    %322 = vmatpush1.bf16.msra.mxu0 0
    %323 = vmatprep.subr.bf16.mxu0 0
    %324 = vmatpush1.bf16.msra.mxu0 0
    %325 = vmatprep.subr.bf16.mxu0 0
    %326 = vmatpush1.bf16.msra.mxu0 0
    %327 = vmatprep.subr.bf16.mxu0 0
    %328 = vmatpush1.bf16.msra.mxu0 0
    %329 = vmatprep.subr.bf16.mxu0 0
    %330 = vmatpush1.bf16.msra.mxu0 0
    %331 = vmatprep.subr.bf16.mxu0 0
    %332 = vmatpush1.bf16.msra.mxu0 0
    %333 = vmatprep.subr.bf16.mxu0 0
    %334 = vmatpush1.bf16.msra.mxu0 0
    %335 = vmatprep.subr.bf16.mxu0 0
    %336 = vmatpush1.bf16.msra.mxu0 0
    %337 = vmatprep.subr.bf16.mxu0 0
    %338 = vmatpush1.bf16.msra.mxu0 0
    %339 = vmatprep.mubr.bf16.mxu0 0
    %340 = vmatmul.mubr.bf16.gmra.mrb[0].mxu0 %v296
    %v341 = vpop.f32.mrb[0].mxu0
    %v342 = vadd.f32 0.0, %v341
    %v343 = vpop.f32.mrb[0].mxu0
    %v344 = vpop.f32.mrb[0].mxu0
    %v345 = vadd.f32 0.0, %v344
    %v346 = vpop.f32.mrb[0].mxu0
    %347 = vmatprep.mubr.bf16.mxu0 0
    %348 = vmatmul.mubr.bf16.gmra.mrb[0].mxu0 %v299
    %v349 = vpop.f32.mrb[0].mxu0
    %v350 = vadd.f32 0.0, %v349
    %v351 = vpop.f32.mrb[0].mxu0
    %v352 = vpop.f32.mrb[0].mxu0
    %v353 = vadd.f32 0.0, %v352
    %v354 = vpop.f32.mrb[0].mxu0
    %355 = vmatprep.mubr.bf16.mxu0 0
    %356 = vmatmul.mubr.bf16.gmra.mrb[0].mxu0 %v302
    %v357 = vpop.f32.mrb[0].mxu0
    %v358 = vadd.f32 0.0, %v357
    %v359 = vpop.f32.mrb[0].mxu0
    %v360 = vpop.f32.mrb[0].mxu0
    %v361 = vadd.f32 0.0, %v360
    %v362 = vpop.f32.mrb[0].mxu0
    %363 = vmatprep.mubr.bf16.mxu0 0
    %364 = vmatmul.mubr.bf16.gmra.mrb[0].mxu0 %v305
    %v365 = vpop.f32.mrb[0].mxu0
    %v366 = vadd.f32 0.0, %v365
    %v367 = vpop.f32.mrb[0].mxu0
    %v368 = vpop.f32.mrb[0].mxu0
    %v369 = vadd.f32 0.0, %v368
    %v370 = vpop.f32.mrb[0].mxu0
    %371 = vdwg.mxu0
    %vm372 = vcmask 523264
    %v373 = vsel %vm372, %v342, 0.0
    %v374 = vsel %vm372, %v345, 0.0
    %v375 = vadd.f32 %v373, %v374
    %v376 = vsel %vm372, %v350, 0.0
    %v377 = vadd.f32 %v375, %v376
    %v378 = vsel %vm372, %v353, 0.0
    %v379 = vadd.f32 %v377, %v378
    %v380 = vsel %vm372, %v358, 0.0
    %v381 = vadd.f32 %v379, %v380
    %v382 = vsel %vm372, %v361, 0.0
    %v383 = vadd.f32 %v381, %v382
    %v384 = vsel %vm372, %v366, 0.0
    %v385 = vadd.f32 %v383, %v384
    %v386 = vsel %vm372, %v369, 0.0
    %v387 = vadd.f32 %v385, %v386
    %v388 = vrot.slane %v387, 4
    %v389 = vadd.f32 %v387, %v388
    %v390 = vrot.slane %v389, 2
    %v391 = vadd.f32 %v389, %v390
    %v392 = vrot.slane %v391, 1
    %v393 = vadd.f32 %v391, %v392
    %v394 = vmul.f32 %v393, %v192
    %v395 = vsub.f32 %v342, %v394
    %v396 = vsub.f32 %v345, %v394
    %v397 = vsub.f32 %v350, %v394
    %v398 = vsub.f32 %v353, %v394
    %v399 = vsub.f32 %v358, %v394
    %v400 = vsub.f32 %v361, %v394
    %v401 = vsub.f32 %v366, %v394
    %v402 = vsub.f32 %v369, %v394
    %v403 = vmul.f32 %v395, %v395
    %v404 = vmul.f32 %v396, %v396
    %v405 = vmul.f32 %v397, %v397
    %v406 = vmul.f32 %v398, %v398
    %v407 = vmul.f32 %v399, %v399
    %v408 = vmul.f32 %v400, %v400
    %v409 = vmul.f32 %v401, %v401
    %v410 = vmul.f32 %v402, %v402
    %v411 = vsel %vm372, %v403, 0.0
    %v412 = vsel %vm372, %v404, 0.0
    %v413 = vadd.f32 %v411, %v412
    %v414 = vsel %vm372, %v405, 0.0
    %v415 = vadd.f32 %v413, %v414
    %v416 = vsel %vm372, %v406, 0.0
    %v417 = vadd.f32 %v415, %v416
    %v418 = vsel %vm372, %v407, 0.0
    %v419 = vadd.f32 %v417, %v418
    %v420 = vsel %vm372, %v408, 0.0
    %v421 = vadd.f32 %v419, %v420
    %v422 = vsel %vm372, %v409, 0.0
    %v423 = vadd.f32 %v421, %v422
    %v424 = vsel %vm372, %v410, 0.0
    %v425 = vadd.f32 %v423, %v424
    %v426 = vrot.slane %v425, 4
    %v427 = vadd.f32 %v425, %v426
    %v428 = vrot.slane %v427, 2
    %v429 = vadd.f32 %v427, %v428
    %v430 = vrot.slane %v429, 1
    %v431 = vadd.f32 %v429, %v430
    %v432 = vmul.f32 %v431, %v192
    %v433 = vadd.f32 %v432, 1e-05
    %v434 = vrsqrt.pop %v433
    %v435 = vmul.f32 %v395, %v434
    %v436 = vmul.f32 %v396, %v434
    %v437 = vmul.f32 %v397, %v434
    %v438 = vmul.f32 %v398, %v434
    %v439 = vmul.f32 %v399, %v434
    %v440 = vmul.f32 %v400, %v434
    %v441 = vmul.f32 %v401, %v434
    %v442 = vmul.f32 %v402, %v434
    %v443 = vlaneseq
    %v444 = vshrl.u32 %v443, 7
    %v445 = vsub.s32 0, %v444
    %v446 = vrot.slane %v278, %v445
    %v447 = vmul.f32 %v446, %v435
    %v448 = vmul.f32 %v446, %v436
    %v449 = vmul.f32 %v446, %v437
    %v450 = vmul.f32 %v446, %v438
    %v451 = vmul.f32 %v446, %v439
    %v452 = vmul.f32 %v446, %v440
    %v453 = vmul.f32 %v446, %v441
    %v454 = vmul.f32 %v446, %v442
    %v455 = vlaneseq
    %v456 = vshrl.u32 %v455, 7
    %v457 = vsub.s32 1, %v456
    %v458 = vrot.slane %v278, %v457
    %v459 = vadd.f32 %v447, %v458
    %v460 = vadd.f32 %v448, %v458
    %v461 = vadd.f32 %v449, %v458
    %v462 = vadd.f32 %v450, %v458
    %v463 = vadd.f32 %v451, %v458
    %v464 = vadd.f32 %v452, %v458
    %v465 = vadd.f32 %v453, %v458
    %v466 = vadd.f32 %v454, %v458
    %v467 = vmax.f32 %v459, 0.0
    %v468 = vmax.f32 %v460, 0.0
    %v469 = vmax.f32 %v461, 0.0
    %v470 = vmax.f32 %v462, 0.0
    %v471 = vmax.f32 %v463, 0.0
    %v472 = vmax.f32 %v464, 0.0
    %v473 = vmax.f32 %v465, 0.0
    %v474 = vmax.f32 %v466, 0.0
    %v475 = vpack.c.bf16 %v468, %v467
    %v476 = vpack.c.bf16 %v470, %v469
    %v477 = vpack.c.bf16 %v472, %v471
    %v478 = vpack.c.bf16 %v474, %v473
    %v479 = vld [vmem:[%s6] sm:$0x3]
    %v480 = vld [vmem:[%s5] sm:$0xf]
    %v481 = vld [vmem:[%s5 + $0x4] sm:$0xf]
    %v482 = vld [vmem:[%s5 + $0x8] sm:$0xf]
    %v483 = vld [vmem:[%s5 + $0xc] sm:$0xf]
    %v484 = vld [vmem:[%s5 + $0x10] sm:$0xf]
    %v485 = vld [vmem:[%s5 + $0x14] sm:$0xf]
    %v486 = vld [vmem:[%s5 + $0x18] sm:$0xf]
    %v487 = vld [vmem:[%s5 + $0x1c] sm:$0xf]
    %v496 = vunpack.c.l.b16 %v480
    %v497 = vunpack.c.l.b16 %v481
    %v498 = vunpack.c.l.b16 %v482
    %v499 = vunpack.c.l.b16 %v483
    %v500 = vunpack.c.l.b16 %v484
    %v501 = vunpack.c.l.b16 %v485
    %v502 = vunpack.c.l.b16 %v486
    %v503 = vunpack.c.l.b16 %v487
    %v504 = vpack.c.b16 %v497, %v496
    %v505 = vpack.c.b16 %v499, %v498
    %v506 = vpack.c.b16 %v501, %v500
    %v507 = vpack.c.b16 %v503, %v502
    %v513 = vsel %vm372, %v475, 0
    %v516 = vsel %vm372, %v476, 0
    %v519 = vsel %vm372, %v477, 0
    %v522 = vsel %vm372, %v478, 0
    %524 = vmatprep.subr.bf16.mxu0 0
    %525 = vmatpush1.bf16.msra.mxu0 %v504
    %526 = vmatprep.subr.bf16.mxu0 0
    %527 = vmatpush1.bf16.msra.mxu0 %v505
    %528 = vmatprep.subr.bf16.mxu0 0
    %529 = vmatpush1.bf16.msra.mxu0 %v506
    %530 = vmatprep.subr.bf16.mxu0 0
    %531 = vmatpush1.bf16.msra.mxu0 %v507
    %532 = vmatprep.subr.bf16.mxu0 0
    %533 = vmatpush1.bf16.msra.mxu0 0
    %534 = vmatprep.subr.bf16.mxu0 0
    %535 = vmatpush1.bf16.msra.mxu0 0
    %536 = vmatprep.subr.bf16.mxu0 0
    %537 = vmatpush1.bf16.msra.mxu0 0
    %538 = vmatprep.subr.bf16.mxu0 0
    %539 = vmatpush1.bf16.msra.mxu0 0
    %540 = vmatprep.subr.bf16.mxu0 0
    %541 = vmatpush1.bf16.msra.mxu0 0
    %542 = vmatprep.subr.bf16.mxu0 0
    %543 = vmatpush1.bf16.msra.mxu0 0
    %544 = vmatprep.subr.bf16.mxu0 0
    %545 = vmatpush1.bf16.msra.mxu0 0
    %546 = vmatprep.subr.bf16.mxu0 0
    %547 = vmatpush1.bf16.msra.mxu0 0
    %548 = vmatprep.subr.bf16.mxu0 0
    %549 = vmatpush1.bf16.msra.mxu0 0
    %550 = vmatprep.subr.bf16.mxu0 0
    %551 = vmatpush1.bf16.msra.mxu0 0
    %552 = vmatprep.subr.bf16.mxu0 0
    %553 = vmatpush1.bf16.msra.mxu0 0
    %554 = vmatprep.subr.bf16.mxu0 0
    %555 = vmatpush1.bf16.msra.mxu0 0
    %556 = vmatprep.mubr.bf16.mxu0 0
    %557 = vmatmul.mubr.bf16.gmra.mrb[0].mxu0 %v513
    %v558 = vpop.f32.mrb[0].mxu0
    %v559 = vadd.f32 0.0, %v558
    %v560 = vpop.f32.mrb[0].mxu0
    %v561 = vpop.f32.mrb[0].mxu0
    %v562 = vadd.f32 0.0, %v561
    %v563 = vpop.f32.mrb[0].mxu0
    %564 = vmatprep.mubr.bf16.mxu0 0
    %565 = vmatmul.mubr.bf16.gmra.mrb[0].mxu0 %v516
    %v566 = vpop.f32.mrb[0].mxu0
    %v567 = vadd.f32 0.0, %v566
    %v568 = vpop.f32.mrb[0].mxu0
    %v569 = vpop.f32.mrb[0].mxu0
    %v570 = vadd.f32 0.0, %v569
    %v571 = vpop.f32.mrb[0].mxu0
    %572 = vmatprep.mubr.bf16.mxu0 0
    %573 = vmatmul.mubr.bf16.gmra.mrb[0].mxu0 %v519
    %v574 = vpop.f32.mrb[0].mxu0
    %v575 = vadd.f32 0.0, %v574
    %v576 = vpop.f32.mrb[0].mxu0
    %v577 = vpop.f32.mrb[0].mxu0
    %v578 = vadd.f32 0.0, %v577
    %v579 = vpop.f32.mrb[0].mxu0
    %580 = vmatprep.mubr.bf16.mxu0 0
    %581 = vmatmul.mubr.bf16.gmra.mrb[0].mxu0 %v522
    %v582 = vpop.f32.mrb[0].mxu0
    %v583 = vadd.f32 0.0, %v582
    %v584 = vpop.f32.mrb[0].mxu0
    %v585 = vpop.f32.mrb[0].mxu0
    %v586 = vadd.f32 0.0, %v585
    %v587 = vpop.f32.mrb[0].mxu0
    %588 = vdwg.mxu0
    %v589 = vadd.f32 %v559, %v562
    %v590 = vadd.f32 %v589, %v567
    %v591 = vadd.f32 %v590, %v570
    %v592 = vadd.f32 %v591, %v575
    %v593 = vadd.f32 %v592, %v578
    %v594 = vadd.f32 %v593, %v583
    %v595 = vadd.f32 %v594, %v586
    %v596 = vrot.slane %v595, 4
    %v597 = vadd.f32 %v595, %v596
    %v598 = vrot.slane %v597, 2
    %v599 = vadd.f32 %v597, %v598
    %v600 = vrot.slane %v599, 1
    %v601 = vadd.f32 %v599, %v600
    %v602 = vmul.f32 %v601, %v192
    %v603 = vsub.f32 %v559, %v602
    %v604 = vsub.f32 %v562, %v602
    %v605 = vsub.f32 %v567, %v602
    %v606 = vsub.f32 %v570, %v602
    %v607 = vsub.f32 %v575, %v602
    %v608 = vsub.f32 %v578, %v602
    %v609 = vsub.f32 %v583, %v602
    %v610 = vsub.f32 %v586, %v602
    %v611 = vmul.f32 %v603, %v603
    %v612 = vmul.f32 %v604, %v604
    %v613 = vmul.f32 %v605, %v605
    %v614 = vmul.f32 %v606, %v606
    %v615 = vmul.f32 %v607, %v607
    %v616 = vmul.f32 %v608, %v608
    %v617 = vmul.f32 %v609, %v609
    %v618 = vmul.f32 %v610, %v610
    %v619 = vadd.f32 %v611, %v612
    %v620 = vadd.f32 %v619, %v613
    %v621 = vadd.f32 %v620, %v614
    %v622 = vadd.f32 %v621, %v615
    %v623 = vadd.f32 %v622, %v616
    %v624 = vadd.f32 %v623, %v617
    %v625 = vadd.f32 %v624, %v618
    %v626 = vrot.slane %v625, 4
    %v627 = vadd.f32 %v625, %v626
    %v628 = vrot.slane %v627, 2
    %v629 = vadd.f32 %v627, %v628
    %v630 = vrot.slane %v629, 1
    %v631 = vadd.f32 %v629, %v630
    %v632 = vmul.f32 %v631, %v192
    %v633 = vadd.f32 %v632, 1e-05
    %v634 = vrsqrt.pop %v633
    %v635 = vmul.f32 %v603, %v634
    %v636 = vmul.f32 %v604, %v634
    %v637 = vmul.f32 %v605, %v634
    %v638 = vmul.f32 %v606, %v634
    %v639 = vmul.f32 %v607, %v634
    %v640 = vmul.f32 %v608, %v634
    %v641 = vmul.f32 %v609, %v634
    %v642 = vmul.f32 %v610, %v634
    %v643 = vlaneseq
    %v644 = vshrl.u32 %v643, 7
    %v645 = vsub.s32 0, %v644
    %v646 = vrot.slane %v479, %v645
    %v647 = vmul.f32 %v646, %v635
    %v648 = vmul.f32 %v646, %v636
    %v649 = vmul.f32 %v646, %v637
    %v650 = vmul.f32 %v646, %v638
    %v651 = vmul.f32 %v646, %v639
    %v652 = vmul.f32 %v646, %v640
    %v653 = vmul.f32 %v646, %v641
    %v654 = vmul.f32 %v646, %v642
    %v655 = vlaneseq
    %v656 = vshrl.u32 %v655, 7
    %v657 = vsub.s32 1, %v656
    %v658 = vrot.slane %v479, %v657
    %v659 = vadd.f32 %v647, %v658
    %v660 = vadd.f32 %v648, %v658
    %v661 = vadd.f32 %v649, %v658
    %v662 = vadd.f32 %v650, %v658
    %v663 = vadd.f32 %v651, %v658
    %v664 = vadd.f32 %v652, %v658
    %v665 = vadd.f32 %v653, %v658
    %v666 = vadd.f32 %v654, %v658
    %v667 = vmax.f32 %v659, 0.0
    %v668 = vmax.f32 %v660, 0.0
    %v669 = vmax.f32 %v661, 0.0
    %v670 = vmax.f32 %v662, 0.0
    %v671 = vmax.f32 %v663, 0.0
    %v672 = vmax.f32 %v664, 0.0
    %v673 = vmax.f32 %v665, 0.0
    %v674 = vmax.f32 %v666, 0.0
    %v675 = vpack.c.bf16 %v668, %v667
    %v676 = vpack.c.bf16 %v670, %v669
    %v677 = vpack.c.bf16 %v672, %v671
    %v678 = vpack.c.bf16 %v674, %v673
    %v679 = vld [vmem:[%s8] sm:$0xf]
    %v680 = vld [vmem:[#allocation2] sm:$0xff]
    %v681 = vld [vmem:[#allocation2 + $0x8] sm:$0xff]
    %v682 = vld [vmem:[#allocation2 + $0x10] sm:$0xff]
    %v683 = vld [vmem:[#allocation2 + $0x18] sm:$0xff]
    %v684 = vld [vmem:[#allocation2 + $0x20] sm:$0xff]
    %v685 = vld [vmem:[#allocation2 + $0x28] sm:$0xff]
    %v686 = vld [vmem:[#allocation2 + $0x30] sm:$0xff]
    %v687 = vld [vmem:[#allocation2 + $0x38] sm:$0xff]
    %v688 = vld [vmem:[#allocation2 + $0x40] sm:$0xff]
    %v689 = vld [vmem:[#allocation2 + $0x48] sm:$0xff]
    %v690 = vld [vmem:[#allocation2 + $0x50] sm:$0xff]
    %v691 = vld [vmem:[#allocation2 + $0x58] sm:$0xff]
    %v692 = vld [vmem:[#allocation2 + $0x60] sm:$0xff]
    %v693 = vld [vmem:[#allocation2 + $0x68] sm:$0xff]
    %v694 = vld [vmem:[#allocation2 + $0x70] sm:$0xff]
    %v695 = vld [vmem:[#allocation2 + $0x78] sm:$0xff]
    %v712 = vunpack.c.l.b16 %v680
    %v713 = vunpack.c.h.b16 %v680
    %v714 = vunpack.c.l.b16 %v681
    %v715 = vunpack.c.h.b16 %v681
    %v716 = vunpack.c.l.b16 %v682
    %v717 = vunpack.c.h.b16 %v682
    %v718 = vunpack.c.l.b16 %v683
    %v719 = vunpack.c.h.b16 %v683
    %v720 = vunpack.c.l.b16 %v684
    %v721 = vunpack.c.h.b16 %v684
    %v722 = vunpack.c.l.b16 %v685
    %v723 = vunpack.c.h.b16 %v685
    %v724 = vunpack.c.l.b16 %v686
    %v725 = vunpack.c.h.b16 %v686
    %v726 = vunpack.c.l.b16 %v687
    %v727 = vunpack.c.h.b16 %v687
    %v728 = vunpack.c.l.b16 %v688
    %v729 = vunpack.c.h.b16 %v688
    %v730 = vunpack.c.l.b16 %v689
    %v731 = vunpack.c.h.b16 %v689
    %v732 = vunpack.c.l.b16 %v690
    %v733 = vunpack.c.h.b16 %v690
    %v734 = vunpack.c.l.b16 %v691
    %v735 = vunpack.c.h.b16 %v691
    %v736 = vunpack.c.l.b16 %v692
    %v737 = vunpack.c.h.b16 %v692
    %v738 = vunpack.c.l.b16 %v693
    %v739 = vunpack.c.h.b16 %v693
    %v740 = vunpack.c.l.b16 %v694
    %v741 = vunpack.c.h.b16 %v694
    %v742 = vunpack.c.l.b16 %v695
    %v743 = vunpack.c.h.b16 %v695
    %v744 = vpack.c.b16 %v714, %v712
    %v745 = vpack.c.b16 %v715, %v713
    %v746 = vpack.c.b16 %v718, %v716
    %v747 = vpack.c.b16 %v719, %v717
    %v748 = vpack.c.b16 %v722, %v720
    %v749 = vpack.c.b16 %v723, %v721
    %v750 = vpack.c.b16 %v726, %v724
    %v751 = vpack.c.b16 %v727, %v725
    %v752 = vpack.c.b16 %v730, %v728
    %v753 = vpack.c.b16 %v731, %v729
    %v754 = vpack.c.b16 %v734, %v732
    %v755 = vpack.c.b16 %v735, %v733
    %v756 = vpack.c.b16 %v738, %v736
    %v757 = vpack.c.b16 %v739, %v737
    %v758 = vpack.c.b16 %v742, %v740
    %v759 = vpack.c.b16 %v743, %v741
    %776 = vmatprep.subr.bf16.mxu0 %v745
    %777 = vmatpush1.bf16.msra.mxu0 %v744
    %778 = vmatprep.subr.bf16.mxu0 %v747
    %779 = vmatpush1.bf16.msra.mxu0 %v746
    %780 = vmatprep.subr.bf16.mxu0 %v749
    %781 = vmatpush1.bf16.msra.mxu0 %v748
    %782 = vmatprep.subr.bf16.mxu0 %v751
    %783 = vmatpush1.bf16.msra.mxu0 %v750
    %784 = vmatprep.subr.bf16.mxu0 %v753
    %785 = vmatpush1.bf16.msra.mxu0 %v752
    %786 = vmatprep.subr.bf16.mxu0 %v755
    %787 = vmatpush1.bf16.msra.mxu0 %v754
    %788 = vmatprep.subr.bf16.mxu0 %v757
    %789 = vmatpush1.bf16.msra.mxu0 %v756
    %790 = vmatprep.subr.bf16.mxu0 %v759
    %791 = vmatpush1.bf16.msra.mxu0 %v758
    %792 = vmatprep.subr.bf16.mxu0 0
    %793 = vmatpush1.bf16.msra.mxu0 0
    %794 = vmatprep.subr.bf16.mxu0 0
    %795 = vmatpush1.bf16.msra.mxu0 0
    %796 = vmatprep.subr.bf16.mxu0 0
    %797 = vmatpush1.bf16.msra.mxu0 0
    %798 = vmatprep.subr.bf16.mxu0 0
    %799 = vmatpush1.bf16.msra.mxu0 0
    %800 = vmatprep.subr.bf16.mxu0 0
    %801 = vmatpush1.bf16.msra.mxu0 0
    %802 = vmatprep.subr.bf16.mxu0 0
    %803 = vmatpush1.bf16.msra.mxu0 0
    %804 = vmatprep.subr.bf16.mxu0 0
    %805 = vmatpush1.bf16.msra.mxu0 0
    %806 = vmatprep.subr.bf16.mxu0 0
    %807 = vmatpush1.bf16.msra.mxu0 0
    %808 = vmatprep.mubr.bf16.mxu0 0
    %809 = vmatmul.mubr.bf16.gmra.mrb[0].mxu0 %v675
    %v810 = vpop.f32.mrb[0].mxu0
    %v811 = vadd.f32 0.0, %v810
    %v812 = vpop.f32.mrb[0].mxu0
    %v813 = vadd.f32 0.0, %v812
    %v814 = vpop.f32.mrb[0].mxu0
    %v815 = vadd.f32 0.0, %v814
    %v816 = vpop.f32.mrb[0].mxu0
    %v817 = vadd.f32 0.0, %v816
    %818 = vmatprep.mubr.bf16.mxu0 0
    %819 = vmatmul.mubr.bf16.gmra.mrb[0].mxu0 %v676
    %v820 = vpop.f32.mrb[0].mxu0
    %v821 = vadd.f32 0.0, %v820
    %v822 = vpop.f32.mrb[0].mxu0
    %v823 = vadd.f32 0.0, %v822
    %v824 = vpop.f32.mrb[0].mxu0
    %v825 = vadd.f32 0.0, %v824
    %v826 = vpop.f32.mrb[0].mxu0
    %v827 = vadd.f32 0.0, %v826
    %828 = vmatprep.mubr.bf16.mxu0 0
    %829 = vmatmul.mubr.bf16.gmra.mrb[0].mxu0 %v677
    %v830 = vpop.f32.mrb[0].mxu0
    %v831 = vadd.f32 0.0, %v830
    %v832 = vpop.f32.mrb[0].mxu0
    %v833 = vadd.f32 0.0, %v832
    %v834 = vpop.f32.mrb[0].mxu0
    %v835 = vadd.f32 0.0, %v834
    %v836 = vpop.f32.mrb[0].mxu0
    %v837 = vadd.f32 0.0, %v836
    %838 = vmatprep.mubr.bf16.mxu0 0
    %839 = vmatmul.mubr.bf16.gmra.mrb[0].mxu0 %v678
    %v840 = vpop.f32.mrb[0].mxu0
    %v841 = vadd.f32 0.0, %v840
    %v842 = vpop.f32.mrb[0].mxu0
    %v843 = vadd.f32 0.0, %v842
    %v844 = vpop.f32.mrb[0].mxu0
    %v845 = vadd.f32 0.0, %v844
    %v846 = vpop.f32.mrb[0].mxu0
    %v847 = vadd.f32 0.0, %v846
    %848 = vdwg.mxu0
    %v849 = vadd.f32 %v811, %v815
    %v850 = vadd.f32 %v849, %v821
    %v851 = vadd.f32 %v850, %v825
    %v852 = vadd.f32 %v851, %v831
    %v853 = vadd.f32 %v852, %v835
    %v854 = vadd.f32 %v853, %v841
    %v855 = vadd.f32 %v854, %v845
    %v856 = vrot.slane %v855, 4
    %v857 = vadd.f32 %v855, %v856
    %v858 = vrot.slane %v857, 2
    %v859 = vadd.f32 %v857, %v858
    %v860 = vrot.slane %v859, 1
    %v861 = vadd.f32 %v859, %v860
    %v862 = vadd.f32 %v813, %v817
    %v863 = vadd.f32 %v862, %v823
    %v864 = vadd.f32 %v863, %v827
    %v865 = vadd.f32 %v864, %v833
    %v866 = vadd.f32 %v865, %v837
    %v867 = vadd.f32 %v866, %v843
    %v868 = vadd.f32 %v867, %v847
    %v869 = vrot.slane %v868, 4
    %v870 = vadd.f32 %v868, %v869
    %v871 = vrot.slane %v870, 2
    %v872 = vadd.f32 %v870, %v871
    %v873 = vrot.slane %v872, 1
    %v874 = vadd.f32 %v872, %v873
    %v875 = vmul.f32 %v861, %v192
    %v876 = vmul.f32 %v874, %v192
    %v877 = vsub.f32 %v811, %v875
    %v878 = vsub.f32 %v813, %v876
    %v879 = vsub.f32 %v815, %v875
    %v880 = vsub.f32 %v817, %v876
    %v881 = vsub.f32 %v821, %v875
    %v882 = vsub.f32 %v823, %v876
    %v883 = vsub.f32 %v825, %v875
    %v884 = vsub.f32 %v827, %v876
    %v885 = vsub.f32 %v831, %v875
    %v886 = vsub.f32 %v833, %v876
    %v887 = vsub.f32 %v835, %v875
    %v888 = vsub.f32 %v837, %v876
    %v889 = vsub.f32 %v841, %v875
    %v890 = vsub.f32 %v843, %v876
    %v891 = vsub.f32 %v845, %v875
    %v892 = vsub.f32 %v847, %v876
    %v893 = vmul.f32 %v877, %v877
    %v894 = vmul.f32 %v878, %v878
    %v895 = vmul.f32 %v879, %v879
    %v896 = vmul.f32 %v880, %v880
    %v897 = vmul.f32 %v881, %v881
    %v898 = vmul.f32 %v882, %v882
    %v899 = vmul.f32 %v883, %v883
    %v900 = vmul.f32 %v884, %v884
    %v901 = vmul.f32 %v885, %v885
    %v902 = vmul.f32 %v886, %v886
    %v903 = vmul.f32 %v887, %v887
    %v904 = vmul.f32 %v888, %v888
    %v905 = vmul.f32 %v889, %v889
    %v906 = vmul.f32 %v890, %v890
    %v907 = vmul.f32 %v891, %v891
    %v908 = vmul.f32 %v892, %v892
    %v909 = vadd.f32 %v893, %v895
    %v910 = vadd.f32 %v909, %v897
    %v911 = vadd.f32 %v910, %v899
    %v912 = vadd.f32 %v911, %v901
    %v913 = vadd.f32 %v912, %v903
    %v914 = vadd.f32 %v913, %v905
    %v915 = vadd.f32 %v914, %v907
    %v916 = vrot.slane %v915, 4
    %v917 = vadd.f32 %v915, %v916
    %v918 = vrot.slane %v917, 2
    %v919 = vadd.f32 %v917, %v918
    %v920 = vrot.slane %v919, 1
    %v921 = vadd.f32 %v919, %v920
    %v922 = vadd.f32 %v894, %v896
    %v923 = vadd.f32 %v922, %v898
    %v924 = vadd.f32 %v923, %v900
    %v925 = vadd.f32 %v924, %v902
    %v926 = vadd.f32 %v925, %v904
    %v927 = vadd.f32 %v926, %v906
    %v928 = vadd.f32 %v927, %v908
    %v929 = vrot.slane %v928, 4
    %v930 = vadd.f32 %v928, %v929
    %v931 = vrot.slane %v930, 2
    %v932 = vadd.f32 %v930, %v931
    %v933 = vrot.slane %v932, 1
    %v934 = vadd.f32 %v932, %v933
    %v935 = vmul.f32 %v921, %v192
    %v936 = vmul.f32 %v934, %v192
    %v937 = vadd.f32 %v935, 1e-05
    %v938 = vadd.f32 %v936, 1e-05
    %v939 = vrsqrt.pop %v937
    %v940 = vrsqrt.pop %v938
    %v941 = vmul.f32 %v877, %v939
    %v942 = vmul.f32 %v878, %v940
    %v943 = vmul.f32 %v879, %v939
    %v944 = vmul.f32 %v880, %v940
    %v945 = vmul.f32 %v881, %v939
    %v946 = vmul.f32 %v882, %v940
    %v947 = vmul.f32 %v883, %v939
    %v948 = vmul.f32 %v884, %v940
    %v949 = vmul.f32 %v885, %v939
    %v950 = vmul.f32 %v886, %v940
    %v951 = vmul.f32 %v887, %v939
    %v952 = vmul.f32 %v888, %v940
    %v953 = vmul.f32 %v889, %v939
    %v954 = vmul.f32 %v890, %v940
    %v955 = vmul.f32 %v891, %v939
    %v956 = vmul.f32 %v892, %v940
    %v958 = vlaneseq
    %v959 = vshrl.u32 %v958, 7
    %v960 = vsub.s32 0, %v959
    %v961 = vrot.slane %v679, %v960
    %v962 = vlaneseq
    %v963 = vshrl.u32 %v962, 7
    %v964 = vsub.s32 2, %v963
    %v965 = vrot.slane %v679, %v964
    %v968 = vlaneseq
    %v969 = vshrl.u32 %v968, 7
    %v970 = vsub.s32 0, %v969
    %v971 = vrot.slane %v961, %v970
    %v972 = vlaneseq
    %v973 = vshrl.u32 %v972, 7
    %v974 = vsub.s32 0, %v973
    %v975 = vrot.slane %v965, %v974
    %v976 = vmul.f32 %v971, %v941
    %v977 = vmul.f32 %v975, %v942
    %v978 = vmul.f32 %v971, %v943
    %v979 = vmul.f32 %v975, %v944
    %v980 = vmul.f32 %v971, %v945
    %v981 = vmul.f32 %v975, %v946
    %v982 = vmul.f32 %v971, %v947
    %v983 = vmul.f32 %v975, %v948
    %v984 = vmul.f32 %v971, %v949
    %v985 = vmul.f32 %v975, %v950
    %v986 = vmul.f32 %v971, %v951
    %v987 = vmul.f32 %v975, %v952
    %v988 = vmul.f32 %v971, %v953
    %v989 = vmul.f32 %v975, %v954
    %v990 = vmul.f32 %v971, %v955
    %v991 = vmul.f32 %v975, %v956
    %v992 = vlaneseq
    %v993 = vshrl.u32 %v992, 7
    %v994 = vsub.s32 1, %v993
    %v995 = vrot.slane %v679, %v994
    %v996 = vlaneseq
    %v997 = vshrl.u32 %v996, 7
    %v998 = vsub.s32 3, %v997
    %v999 = vrot.slane %v679, %v998
    %v1002 = vlaneseq
    %v1003 = vshrl.u32 %v1002, 7
    %v1004 = vsub.s32 1, %v1003
    %v1005 = vrot.slane %v995, %v1004
    %v1006 = vlaneseq
    %v1007 = vshrl.u32 %v1006, 7
    %v1008 = vsub.s32 1, %v1007
    %v1009 = vrot.slane %v999, %v1008
    %v1010 = vadd.f32 %v976, %v1005
    %v1011 = vadd.f32 %v977, %v1009
    %v1012 = vadd.f32 %v978, %v1005
    %v1013 = vadd.f32 %v979, %v1009
    %v1014 = vadd.f32 %v980, %v1005
    %v1015 = vadd.f32 %v981, %v1009
    %v1016 = vadd.f32 %v982, %v1005
    %v1017 = vadd.f32 %v983, %v1009
    %v1018 = vadd.f32 %v984, %v1005
    %v1019 = vadd.f32 %v985, %v1009
    %v1020 = vadd.f32 %v986, %v1005
    %v1021 = vadd.f32 %v987, %v1009
    %v1022 = vadd.f32 %v988, %v1005
    %v1023 = vadd.f32 %v989, %v1009
    %v1024 = vadd.f32 %v990, %v1005
    %v1025 = vadd.f32 %v991, %v1009
    %v1026 = vmax.f32 %v1010, 0.0
    %v1027 = vmax.f32 %v1011, 0.0
    %v1028 = vmax.f32 %v1012, 0.0
    %v1029 = vmax.f32 %v1013, 0.0
    %v1030 = vmax.f32 %v1014, 0.0
    %v1031 = vmax.f32 %v1015, 0.0
    %v1032 = vmax.f32 %v1016, 0.0
    %v1033 = vmax.f32 %v1017, 0.0
    %v1034 = vmax.f32 %v1018, 0.0
    %v1035 = vmax.f32 %v1019, 0.0
    %v1036 = vmax.f32 %v1020, 0.0
    %v1037 = vmax.f32 %v1021, 0.0
    %v1038 = vmax.f32 %v1022, 0.0
    %v1039 = vmax.f32 %v1023, 0.0
    %v1040 = vmax.f32 %v1024, 0.0
    %v1041 = vmax.f32 %v1025, 0.0
    %v1042 = vpack.c.bf16 %v1028, %v1026
    %v1043 = vpack.c.bf16 %v1029, %v1027
    %v1044 = vpack.c.bf16 %v1032, %v1030
    %v1045 = vpack.c.bf16 %v1033, %v1031
    %v1046 = vpack.c.bf16 %v1036, %v1034
    %v1047 = vpack.c.bf16 %v1037, %v1035
    %v1048 = vpack.c.bf16 %v1040, %v1038
    %v1049 = vpack.c.bf16 %v1041, %v1039
    %v1050 = vld [vmem:[#allocation5] sm:$0xff]
    %v1051 = vld [vmem:[#allocation5 + $0x8] sm:$0xff]
    %v1052 = vld [vmem:[#allocation5 + $0x10] sm:$0xff]
    %v1053 = vld [vmem:[#allocation5 + $0x18] sm:$0xf]
    %v1054 = vld [vmem:[#allocation5 + $0x1c] sm:$0xff]
    %v1055 = vld [vmem:[#allocation5 + $0x24] sm:$0xff]
    %v1056 = vld [vmem:[#allocation5 + $0x2c] sm:$0xff]
    %v1057 = vld [vmem:[#allocation5 + $0x34] sm:$0xf]
    %v1058 = vld [vmem:[#allocation5 + $0x38] sm:$0xff]
    %v1059 = vld [vmem:[#allocation5 + $0x40] sm:$0xff]
    %v1060 = vld [vmem:[#allocation5 + $0x48] sm:$0xff]
    %v1061 = vld [vmem:[#allocation5 + $0x50] sm:$0xf]
    %v1062 = vld [vmem:[#allocation5 + $0x54] sm:$0xff]
    %v1063 = vld [vmem:[#allocation5 + $0x5c] sm:$0xff]
    %v1064 = vld [vmem:[#allocation5 + $0x64] sm:$0xff]
    %v1065 = vld [vmem:[#allocation5 + $0x6c] sm:$0xf]
    %v1066 = vld [vmem:[#allocation5 + $0x70] sm:$0xff]
    %v1067 = vld [vmem:[#allocation5 + $0x78] sm:$0xff]
    %v1068 = vld [vmem:[#allocation5 + $0x80] sm:$0xff]
    %v1069 = vld [vmem:[#allocation5 + $0x88] sm:$0xf]
    %v1070 = vld [vmem:[#allocation5 + $0x8c] sm:$0xff]
    %v1071 = vld [vmem:[#allocation5 + $0x94] sm:$0xff]
    %v1072 = vld [vmem:[#allocation5 + $0x9c] sm:$0xff]
    %v1073 = vld [vmem:[#allocation5 + $0xa4] sm:$0xf]
    %v1074 = vld [vmem:[#allocation5 + $0xa8] sm:$0xff]
    %v1075 = vld [vmem:[#allocation5 + $0xb0] sm:$0xff]
    %v1076 = vld [vmem:[#allocation5 + $0xb8] sm:$0xff]
    %v1077 = vld [vmem:[#allocation5 + $0xc0] sm:$0xf]
    %v1078 = vld [vmem:[#allocation5 + $0xc4] sm:$0xff]
    %v1079 = vld [vmem:[#allocation5 + $0xcc] sm:$0xff]
    %v1080 = vld [vmem:[#allocation5 + $0xd4] sm:$0xff]
    %v1081 = vld [vmem:[#allocation5 + $0xdc] sm:$0xf]
    %v1082 = vld [vmem:[#allocation5 + $0xe0] sm:$0xff]
    %v1083 = vld [vmem:[#allocation5 + $0xe8] sm:$0xff]
    %v1084 = vld [vmem:[#allocation5 + $0xf0] sm:$0xff]
    %v1085 = vld [vmem:[#allocation5 + $0xf8] sm:$0xf]
    %v1086 = vld [vmem:[#allocation5 + $0xfc] sm:$0xff]
    %v1087 = vld [vmem:[#allocation5 + $0x104] sm:$0xff]
    %v1088 = vld [vmem:[#allocation5 + $0x10c] sm:$0xff]
    %v1089 = vld [vmem:[#allocation5 + $0x114] sm:$0xf]
    %v1090 = vld [vmem:[#allocation5 + $0x118] sm:$0xff]
    %v1091 = vld [vmem:[#allocation5 + $0x120] sm:$0xff]
    %v1092 = vld [vmem:[#allocation5 + $0x128] sm:$0xff]
    %v1093 = vld [vmem:[#allocation5 + $0x130] sm:$0xf]
    %v1094 = vld [vmem:[#allocation5 + $0x134] sm:$0xff]
    %v1095 = vld [vmem:[#allocation5 + $0x13c] sm:$0xff]
    %v1096 = vld [vmem:[#allocation5 + $0x144] sm:$0xff]
    %v1097 = vld [vmem:[#allocation5 + $0x14c] sm:$0xf]
    %v1098 = vld [vmem:[#allocation5 + $0x150] sm:$0xff]
    %v1099 = vld [vmem:[#allocation5 + $0x158] sm:$0xff]
    %v1100 = vld [vmem:[#allocation5 + $0x160] sm:$0xff]
    %v1101 = vld [vmem:[#allocation5 + $0x168] sm:$0xf]
    %v1102 = vld [vmem:[#allocation5 + $0x16c] sm:$0xff]
    %v1103 = vld [vmem:[#allocation5 + $0x174] sm:$0xff]
    %v1104 = vld [vmem:[#allocation5 + $0x17c] sm:$0xff]
    %v1105 = vld [vmem:[#allocation5 + $0x184] sm:$0xf]
    %v1106 = vld [vmem:[#allocation5 + $0x188] sm:$0xff]
    %v1107 = vld [vmem:[#allocation5 + $0x190] sm:$0xff]
    %v1108 = vld [vmem:[#allocation5 + $0x198] sm:$0xff]
    %v1109 = vld [vmem:[#allocation5 + $0x1a0] sm:$0xf]
    %v1110 = vld [vmem:[#allocation5 + $0x1a4] sm:$0xff]
    %v1111 = vld [vmem:[#allocation5 + $0x1ac] sm:$0xff]
    %v1112 = vld [vmem:[#allocation5 + $0x1b4] sm:$0xff]
    %v1113 = vld [vmem:[#allocation5 + $0x1bc] sm:$0xf]
    %v1114 = vld [vmem:[#allocation5 + $0x1c0] sm:$0xff]
    %v1115 = vld [vmem:[#allocation5 + $0x1c8] sm:$0xff]
    %v1116 = vld [vmem:[#allocation5 + $0x1d0] sm:$0xff]
    %v1117 = vld [vmem:[#allocation5 + $0x1d8] sm:$0xf]
    %v1118 = vld [vmem:[#allocation5 + $0x1dc] sm:$0xff]
    %v1119 = vld [vmem:[#allocation5 + $0x1e4] sm:$0xff]
    %v1120 = vld [vmem:[#allocation5 + $0x1ec] sm:$0xff]
    %v1121 = vld [vmem:[#allocation5 + $0x1f4] sm:$0xf]
    %v1122 = vld [vmem:[#allocation5 + $0x1f8] sm:$0xff]
    %v1123 = vld [vmem:[#allocation5 + $0x200] sm:$0xff]
    %v1124 = vld [vmem:[#allocation5 + $0x208] sm:$0xff]
    %v1125 = vld [vmem:[#allocation5 + $0x210] sm:$0xf]
    %v1126 = vld [vmem:[#allocation5 + $0x214] sm:$0xff]
    %v1127 = vld [vmem:[#allocation5 + $0x21c] sm:$0xff]
    %v1128 = vld [vmem:[#allocation5 + $0x224] sm:$0xff]
    %v1129 = vld [vmem:[#allocation5 + $0x22c] sm:$0xf]
    %v1130 = vld [vmem:[#allocation5 + $0x230] sm:$0xff]
    %v1131 = vld [vmem:[#allocation5 + $0x238] sm:$0xff]
    %v1132 = vld [vmem:[#allocation5 + $0x240] sm:$0xff]
    %v1133 = vld [vmem:[#allocation5 + $0x248] sm:$0xf]
    %v1134 = vld [vmem:[#allocation5 + $0x24c] sm:$0xff]
    %v1135 = vld [vmem:[#allocation5 + $0x254] sm:$0xff]
    %v1136 = vld [vmem:[#allocation5 + $0x25c] sm:$0xff]
    %v1137 = vld [vmem:[#allocation5 + $0x264] sm:$0xf]
    %v1138 = vld [vmem:[#allocation5 + $0x268] sm:$0xff]
    %v1139 = vld [vmem:[#allocation5 + $0x270] sm:$0xff]
    %v1140 = vld [vmem:[#allocation5 + $0x278] sm:$0xff]
    %v1141 = vld [vmem:[#allocation5 + $0x280] sm:$0xf]
    %v1142 = vld [vmem:[#allocation5 + $0x284] sm:$0xff]
    %v1143 = vld [vmem:[#allocation5 + $0x28c] sm:$0xff]
    %v1144 = vld [vmem:[#allocation5 + $0x294] sm:$0xff]
    %v1145 = vld [vmem:[#allocation5 + $0x29c] sm:$0xf]
    %v1146 = vld [vmem:[#allocation5 + $0x2a0] sm:$0xff]
    %v1147 = vld [vmem:[#allocation5 + $0x2a8] sm:$0xff]
    %v1148 = vld [vmem:[#allocation5 + $0x2b0] sm:$0xff]
    %v1149 = vld [vmem:[#allocation5 + $0x2b8] sm:$0xf]
    %v1150 = vld [vmem:[#allocation5 + $0x2bc] sm:$0xff]
    %v1151 = vld [vmem:[#allocation5 + $0x2c4] sm:$0xff]
    %v1152 = vld [vmem:[#allocation5 + $0x2cc] sm:$0xff]
    %v1153 = vld [vmem:[#allocation5 + $0x2d4] sm:$0xf]
    %v1154 = vld [vmem:[#allocation5 + $0x2d8] sm:$0xff]
    %v1155 = vld [vmem:[#allocation5 + $0x2e0] sm:$0xff]
    %v1156 = vld [vmem:[#allocation5 + $0x2e8] sm:$0xff]
    %v1157 = vld [vmem:[#allocation5 + $0x2f0] sm:$0xf]
    %v1158 = vld [vmem:[#allocation5 + $0x2f4] sm:$0xff]
    %v1159 = vld [vmem:[#allocation5 + $0x2fc] sm:$0xff]
    %v1160 = vld [vmem:[#allocation5 + $0x304] sm:$0xff]
    %v1161 = vld [vmem:[#allocation5 + $0x30c] sm:$0xf]
    %v1162 = vld [vmem:[#allocation5 + $0x310] sm:$0xff]
    %v1163 = vld [vmem:[#allocation5 + $0x318] sm:$0xff]
    %v1164 = vld [vmem:[#allocation5 + $0x320] sm:$0xff]
    %v1165 = vld [vmem:[#allocation5 + $0x328] sm:$0xf]
    %v1166 = vld [vmem:[#allocation5 + $0x32c] sm:$0xff]
    %v1167 = vld [vmem:[#allocation5 + $0x334] sm:$0xff]
    %v1168 = vld [vmem:[#allocation5 + $0x33c] sm:$0xff]
    %v1169 = vld [vmem:[#allocation5 + $0x344] sm:$0xf]
    %v1170 = vld [vmem:[#allocation5 + $0x348] sm:$0xff]
    %v1171 = vld [vmem:[#allocation5 + $0x350] sm:$0xff]
    %v1172 = vld [vmem:[#allocation5 + $0x358] sm:$0xff]
    %v1173 = vld [vmem:[#allocation5 + $0x360] sm:$0xf]
    %v1174 = vld [vmem:[#allocation5 + $0x364] sm:$0xff]
    %v1175 = vld [vmem:[#allocation5 + $0x36c] sm:$0xff]
    %v1176 = vld [vmem:[#allocation5 + $0x374] sm:$0xff]
    %v1177 = vld [vmem:[#allocation5 + $0x37c] sm:$0xf]
    %v1178 = vld [vmem:[%s10] sm:$0xff]
    %v1180 = vlaneseq
    %v1181 = vshrl.u32 %v1180, 7
    %v1182 = vsub.s32 0, %v1181
    %v1183 = vrot.slane %v1178, %v1182
    %v1184 = vlaneseq
    %v1185 = vshrl.u32 %v1184, 7
    %v1186 = vsub.s32 1, %v1185
    %v1187 = vrot.slane %v1178, %v1186
    %v1188 = vlaneseq
    %v1189 = vshrl.u32 %v1188, 7
    %v1190 = vsub.s32 2, %v1189
    %v1191 = vrot.slane %v1178, %v1190
    %v1192 = vlaneseq
    %v1193 = vshrl.u32 %v1192, 7
    %v1194 = vsub.s32 3, %v1193
    %v1195 = vrot.slane %v1178, %v1194
    %v1196 = vlaneseq
    %v1197 = vshrl.u32 %v1196, 7
    %v1198 = vsub.s32 4, %v1197
    %v1199 = vrot.slane %v1178, %v1198
    %v1200 = vlaneseq
    %v1201 = vshrl.u32 %v1200, 7
    %v1202 = vsub.s32 5, %v1201
    %v1203 = vrot.slane %v1178, %v1202
    %v1204 = vlaneseq
    %v1205 = vshrl.u32 %v1204, 7
    %v1206 = vsub.s32 6, %v1205
    %v1207 = vrot.slane %v1178, %v1206
    %v1343 = vunpack.c.l.b16 %v1050
    %v1344 = vunpack.c.h.b16 %v1050
    %v1345 = vunpack.c.l.b16 %v1051
    %v1346 = vunpack.c.h.b16 %v1051
    %v1347 = vunpack.c.l.b16 %v1052
    %v1348 = vunpack.c.h.b16 %v1052
    %v1349 = vunpack.c.l.b16 %v1053
    %v1350 = vunpack.c.l.b16 %v1054
    %v1351 = vunpack.c.h.b16 %v1054
    %v1352 = vunpack.c.l.b16 %v1055
    %v1353 = vunpack.c.h.b16 %v1055
    %v1354 = vunpack.c.l.b16 %v1056
    %v1355 = vunpack.c.h.b16 %v1056
    %v1356 = vunpack.c.l.b16 %v1057
    %v1357 = vunpack.c.l.b16 %v1058
    %v1358 = vunpack.c.h.b16 %v1058
    %v1359 = vunpack.c.l.b16 %v1059
    %v1360 = vunpack.c.h.b16 %v1059
    %v1361 = vunpack.c.l.b16 %v1060
    %v1362 = vunpack.c.h.b16 %v1060
    %v1363 = vunpack.c.l.b16 %v1061
    %v1364 = vunpack.c.l.b16 %v1062
    %v1365 = vunpack.c.h.b16 %v1062
    %v1366 = vunpack.c.l.b16 %v1063
    %v1367 = vunpack.c.h.b16 %v1063
    %v1368 = vunpack.c.l.b16 %v1064
    %v1369 = vunpack.c.h.b16 %v1064
    %v1370 = vunpack.c.l.b16 %v1065
    %v1371 = vunpack.c.l.b16 %v1066
    %v1372 = vunpack.c.h.b16 %v1066
    %v1373 = vunpack.c.l.b16 %v1067
    %v1374 = vunpack.c.h.b16 %v1067
    %v1375 = vunpack.c.l.b16 %v1068
    %v1376 = vunpack.c.h.b16 %v1068
    %v1377 = vunpack.c.l.b16 %v1069
    %v1378 = vunpack.c.l.b16 %v1070
    %v1379 = vunpack.c.h.b16 %v1070
    %v1380 = vunpack.c.l.b16 %v1071
    %v1381 = vunpack.c.h.b16 %v1071
    %v1382 = vunpack.c.l.b16 %v1072
    %v1383 = vunpack.c.h.b16 %v1072
    %v1384 = vunpack.c.l.b16 %v1073
    %v1385 = vunpack.c.l.b16 %v1074
    %v1386 = vunpack.c.h.b16 %v1074
    %v1387 = vunpack.c.l.b16 %v1075
    %v1388 = vunpack.c.h.b16 %v1075
    %v1389 = vunpack.c.l.b16 %v1076
    %v1390 = vunpack.c.h.b16 %v1076
    %v1391 = vunpack.c.l.b16 %v1077
    %v1392 = vunpack.c.l.b16 %v1078
    %v1393 = vunpack.c.h.b16 %v1078
    %v1394 = vunpack.c.l.b16 %v1079
    %v1395 = vunpack.c.h.b16 %v1079
    %v1396 = vunpack.c.l.b16 %v1080
    %v1397 = vunpack.c.h.b16 %v1080
    %v1398 = vunpack.c.l.b16 %v1081
    %v1399 = vunpack.c.l.b16 %v1082
    %v1400 = vunpack.c.h.b16 %v1082
    %v1401 = vunpack.c.l.b16 %v1083
    %v1402 = vunpack.c.h.b16 %v1083
    %v1403 = vunpack.c.l.b16 %v1084
    %v1404 = vunpack.c.h.b16 %v1084
    %v1405 = vunpack.c.l.b16 %v1085
    %v1406 = vunpack.c.l.b16 %v1086
    %v1407 = vunpack.c.h.b16 %v1086
    %v1408 = vunpack.c.l.b16 %v1087
    %v1409 = vunpack.c.h.b16 %v1087
    %v1410 = vunpack.c.l.b16 %v1088
    %v1411 = vunpack.c.h.b16 %v1088
    %v1412 = vunpack.c.l.b16 %v1089
    %v1413 = vunpack.c.l.b16 %v1090
    %v1414 = vunpack.c.h.b16 %v1090
    %v1415 = vunpack.c.l.b16 %v1091
    %v1416 = vunpack.c.h.b16 %v1091
    %v1417 = vunpack.c.l.b16 %v1092
    %v1418 = vunpack.c.h.b16 %v1092
    %v1419 = vunpack.c.l.b16 %v1093
    %v1420 = vunpack.c.l.b16 %v1094
    %v1421 = vunpack.c.h.b16 %v1094
    %v1422 = vunpack.c.l.b16 %v1095
    %v1423 = vunpack.c.h.b16 %v1095
    %v1424 = vunpack.c.l.b16 %v1096
    %v1425 = vunpack.c.h.b16 %v1096
    %v1426 = vunpack.c.l.b16 %v1097
    %v1427 = vunpack.c.l.b16 %v1098
    %v1428 = vunpack.c.h.b16 %v1098
    %v1429 = vunpack.c.l.b16 %v1099
    %v1430 = vunpack.c.h.b16 %v1099
    %v1431 = vunpack.c.l.b16 %v1100
    %v1432 = vunpack.c.h.b16 %v1100
    %v1433 = vunpack.c.l.b16 %v1101
    %v1434 = vunpack.c.l.b16 %v1102
    %v1435 = vunpack.c.h.b16 %v1102
    %v1436 = vunpack.c.l.b16 %v1103
    %v1437 = vunpack.c.h.b16 %v1103
    %v1438 = vunpack.c.l.b16 %v1104
    %v1439 = vunpack.c.h.b16 %v1104
    %v1440 = vunpack.c.l.b16 %v1105
    %v1441 = vunpack.c.l.b16 %v1106
    %v1442 = vunpack.c.h.b16 %v1106
    %v1443 = vunpack.c.l.b16 %v1107
    %v1444 = vunpack.c.h.b16 %v1107
    %v1445 = vunpack.c.l.b16 %v1108
    %v1446 = vunpack.c.h.b16 %v1108
    %v1447 = vunpack.c.l.b16 %v1109
    %v1448 = vunpack.c.l.b16 %v1110
    %v1449 = vunpack.c.h.b16 %v1110
    %v1450 = vunpack.c.l.b16 %v1111
    %v1451 = vunpack.c.h.b16 %v1111
    %v1452 = vunpack.c.l.b16 %v1112
    %v1453 = vunpack.c.h.b16 %v1112
    %v1454 = vunpack.c.l.b16 %v1113
    %v1455 = vunpack.c.l.b16 %v1114
    %v1456 = vunpack.c.h.b16 %v1114
    %v1457 = vunpack.c.l.b16 %v1115
    %v1458 = vunpack.c.h.b16 %v1115
    %v1459 = vunpack.c.l.b16 %v1116
    %v1460 = vunpack.c.h.b16 %v1116
    %v1461 = vunpack.c.l.b16 %v1117
    %v1462 = vunpack.c.l.b16 %v1118
    %v1463 = vunpack.c.h.b16 %v1118
    %v1464 = vunpack.c.l.b16 %v1119
    %v1465 = vunpack.c.h.b16 %v1119
    %v1466 = vunpack.c.l.b16 %v1120
    %v1467 = vunpack.c.h.b16 %v1120
    %v1468 = vunpack.c.l.b16 %v1121
    %v1469 = vunpack.c.l.b16 %v1122
    %v1470 = vunpack.c.h.b16 %v1122
    %v1471 = vunpack.c.l.b16 %v1123
    %v1472 = vunpack.c.h.b16 %v1123
    %v1473 = vunpack.c.l.b16 %v1124
    %v1474 = vunpack.c.h.b16 %v1124
    %v1475 = vunpack.c.l.b16 %v1125
    %v1476 = vunpack.c.l.b16 %v1126
    %v1477 = vunpack.c.h.b16 %v1126
    %v1478 = vunpack.c.l.b16 %v1127
    %v1479 = vunpack.c.h.b16 %v1127
    %v1480 = vunpack.c.l.b16 %v1128
    %v1481 = vunpack.c.h.b16 %v1128
    %v1482 = vunpack.c.l.b16 %v1129
    %v1483 = vunpack.c.l.b16 %v1130
    %v1484 = vunpack.c.h.b16 %v1130
    %v1485 = vunpack.c.l.b16 %v1131
    %v1486 = vunpack.c.h.b16 %v1131
    %v1487 = vunpack.c.l.b16 %v1132
    %v1488 = vunpack.c.h.b16 %v1132
    %v1489 = vunpack.c.l.b16 %v1133
    %v1490 = vunpack.c.l.b16 %v1134
    %v1491 = vunpack.c.h.b16 %v1134
    %v1492 = vunpack.c.l.b16 %v1135
    %v1493 = vunpack.c.h.b16 %v1135
    %v1494 = vunpack.c.l.b16 %v1136
    %v1495 = vunpack.c.h.b16 %v1136
    %v1496 = vunpack.c.l.b16 %v1137
    %v1497 = vunpack.c.l.b16 %v1138
    %v1498 = vunpack.c.h.b16 %v1138
    %v1499 = vunpack.c.l.b16 %v1139
    %v1500 = vunpack.c.h.b16 %v1139
    %v1501 = vunpack.c.l.b16 %v1140
    %v1502 = vunpack.c.h.b16 %v1140
    %v1503 = vunpack.c.l.b16 %v1141
    %v1504 = vunpack.c.l.b16 %v1142
    %v1505 = vunpack.c.h.b16 %v1142
    %v1506 = vunpack.c.l.b16 %v1143
    %v1507 = vunpack.c.h.b16 %v1143
    %v1508 = vunpack.c.l.b16 %v1144
    %v1509 = vunpack.c.h.b16 %v1144
    %v1510 = vunpack.c.l.b16 %v1145
    %v1511 = vunpack.c.l.b16 %v1146
    %v1512 = vunpack.c.h.b16 %v1146
    %v1513 = vunpack.c.l.b16 %v1147
    %v1514 = vunpack.c.h.b16 %v1147
    %v1515 = vunpack.c.l.b16 %v1148
    %v1516 = vunpack.c.h.b16 %v1148
    %v1517 = vunpack.c.l.b16 %v1149
    %v1518 = vunpack.c.l.b16 %v1150
    %v1519 = vunpack.c.h.b16 %v1150
    %v1520 = vunpack.c.l.b16 %v1151
    %v1521 = vunpack.c.h.b16 %v1151
    %v1522 = vunpack.c.l.b16 %v1152
    %v1523 = vunpack.c.h.b16 %v1152
    %v1524 = vunpack.c.l.b16 %v1153
    %v1525 = vunpack.c.l.b16 %v1154
    %v1526 = vunpack.c.h.b16 %v1154
    %v1527 = vunpack.c.l.b16 %v1155
    %v1528 = vunpack.c.h.b16 %v1155
    %v1529 = vunpack.c.l.b16 %v1156
    %v1530 = vunpack.c.h.b16 %v1156
    %v1531 = vunpack.c.l.b16 %v1157
    %v1532 = vunpack.c.l.b16 %v1158
    %v1533 = vunpack.c.h.b16 %v1158
    %v1534 = vunpack.c.l.b16 %v1159
    %v1535 = vunpack.c.h.b16 %v1159
    %v1536 = vunpack.c.l.b16 %v1160
    %v1537 = vunpack.c.h.b16 %v1160
    %v1538 = vunpack.c.l.b16 %v1161
    %v1539 = vunpack.c.l.b16 %v1162
    %v1540 = vunpack.c.h.b16 %v1162
    %v1541 = vunpack.c.l.b16 %v1163
    %v1542 = vunpack.c.h.b16 %v1163
    %v1543 = vunpack.c.l.b16 %v1164
    %v1544 = vunpack.c.h.b16 %v1164
    %v1545 = vunpack.c.l.b16 %v1165
    %v1546 = vunpack.c.l.b16 %v1166
    %v1547 = vunpack.c.h.b16 %v1166
    %v1548 = vunpack.c.l.b16 %v1167
    %v1549 = vunpack.c.h.b16 %v1167
    %v1550 = vunpack.c.l.b16 %v1168
    %v1551 = vunpack.c.h.b16 %v1168
    %v1552 = vunpack.c.l.b16 %v1169
    %v1553 = vunpack.c.l.b16 %v1170
    %v1554 = vunpack.c.h.b16 %v1170
    %v1555 = vunpack.c.l.b16 %v1171
    %v1556 = vunpack.c.h.b16 %v1171
    %v1557 = vunpack.c.l.b16 %v1172
    %v1558 = vunpack.c.h.b16 %v1172
    %v1559 = vunpack.c.l.b16 %v1173
    %v1560 = vunpack.c.l.b16 %v1174
    %v1561 = vunpack.c.h.b16 %v1174
    %v1562 = vunpack.c.l.b16 %v1175
    %v1563 = vunpack.c.h.b16 %v1175
    %v1564 = vunpack.c.l.b16 %v1176
    %v1565 = vunpack.c.h.b16 %v1176
    %v1566 = vunpack.c.l.b16 %v1177
    %v1567 = vpack.c.b16 %v1350, %v1343
    %v1568 = vpack.c.b16 %v1351, %v1344
    %v1569 = vpack.c.b16 %v1352, %v1345
    %v1570 = vpack.c.b16 %v1353, %v1346
    %v1571 = vpack.c.b16 %v1354, %v1347
    %v1572 = vpack.c.b16 %v1355, %v1348
    %v1573 = vpack.c.b16 %v1356, %v1349
    %v1574 = vpack.c.b16 %v1364, %v1357
    %v1575 = vpack.c.b16 %v1365, %v1358
    %v1576 = vpack.c.b16 %v1366, %v1359
    %v1577 = vpack.c.b16 %v1367, %v1360
    %v1578 = vpack.c.b16 %v1368, %v1361
    %v1579 = vpack.c.b16 %v1369, %v1362
    %v1580 = vpack.c.b16 %v1370, %v1363
    %v1581 = vpack.c.b16 %v1378, %v1371
    %v1582 = vpack.c.b16 %v1379, %v1372
    %v1583 = vpack.c.b16 %v1380, %v1373
    %v1584 = vpack.c.b16 %v1381, %v1374
    %v1585 = vpack.c.b16 %v1382, %v1375
    %v1586 = vpack.c.b16 %v1383, %v1376
    %v1587 = vpack.c.b16 %v1384, %v1377
    %v1588 = vpack.c.b16 %v1392, %v1385
    %v1589 = vpack.c.b16 %v1393, %v1386
    %v1590 = vpack.c.b16 %v1394, %v1387
    %v1591 = vpack.c.b16 %v1395, %v1388
    %v1592 = vpack.c.b16 %v1396, %v1389
    %v1593 = vpack.c.b16 %v1397, %v1390
    %v1594 = vpack.c.b16 %v1398, %v1391
    %v1595 = vpack.c.b16 %v1406, %v1399
    %v1596 = vpack.c.b16 %v1407, %v1400
    %v1597 = vpack.c.b16 %v1408, %v1401
    %v1598 = vpack.c.b16 %v1409, %v1402
    %v1599 = vpack.c.b16 %v1410, %v1403
    %v1600 = vpack.c.b16 %v1411, %v1404
    %v1601 = vpack.c.b16 %v1412, %v1405
    %v1602 = vpack.c.b16 %v1420, %v1413
    %v1603 = vpack.c.b16 %v1421, %v1414
    %v1604 = vpack.c.b16 %v1422, %v1415
    %v1605 = vpack.c.b16 %v1423, %v1416
    %v1606 = vpack.c.b16 %v1424, %v1417
    %v1607 = vpack.c.b16 %v1425, %v1418
    %v1608 = vpack.c.b16 %v1426, %v1419
    %v1609 = vpack.c.b16 %v1434, %v1427
    %v1610 = vpack.c.b16 %v1435, %v1428
    %v1611 = vpack.c.b16 %v1436, %v1429
    %v1612 = vpack.c.b16 %v1437, %v1430
    %v1613 = vpack.c.b16 %v1438, %v1431
    %v1614 = vpack.c.b16 %v1439, %v1432
    %v1615 = vpack.c.b16 %v1440, %v1433
    %v1616 = vpack.c.b16 %v1448, %v1441
    %v1617 = vpack.c.b16 %v1449, %v1442
    %v1618 = vpack.c.b16 %v1450, %v1443
    %v1619 = vpack.c.b16 %v1451, %v1444
    %v1620 = vpack.c.b16 %v1452, %v1445
    %v1621 = vpack.c.b16 %v1453, %v1446
    %v1622 = vpack.c.b16 %v1454, %v1447
    %v1623 = vpack.c.b16 %v1462, %v1455
    %v1624 = vpack.c.b16 %v1463, %v1456
    %v1625 = vpack.c.b16 %v1464, %v1457
    %v1626 = vpack.c.b16 %v1465, %v1458
    %v1627 = vpack.c.b16 %v1466, %v1459
    %v1628 = vpack.c.b16 %v1467, %v1460
    %v1629 = vpack.c.b16 %v1468, %v1461
    %v1630 = vpack.c.b16 %v1476, %v1469
    %v1631 = vpack.c.b16 %v1477, %v1470
    %v1632 = vpack.c.b16 %v1478, %v1471
    %v1633 = vpack.c.b16 %v1479, %v1472
    %v1634 = vpack.c.b16 %v1480, %v1473
    %v1635 = vpack.c.b16 %v1481, %v1474
    %v1636 = vpack.c.b16 %v1482, %v1475
    %v1637 = vpack.c.b16 %v1490, %v1483
    %v1638 = vpack.c.b16 %v1491, %v1484
    %v1639 = vpack.c.b16 %v1492, %v1485
    %v1640 = vpack.c.b16 %v1493, %v1486
    %v1641 = vpack.c.b16 %v1494, %v1487
    %v1642 = vpack.c.b16 %v1495, %v1488
    %v1643 = vpack.c.b16 %v1496, %v1489
    %v1644 = vpack.c.b16 %v1504, %v1497
    %v1645 = vpack.c.b16 %v1505, %v1498
    %v1646 = vpack.c.b16 %v1506, %v1499
    %v1647 = vpack.c.b16 %v1507, %v1500
    %v1648 = vpack.c.b16 %v1508, %v1501
    %v1649 = vpack.c.b16 %v1509, %v1502
    %v1650 = vpack.c.b16 %v1510, %v1503
    %v1651 = vpack.c.b16 %v1518, %v1511
    %v1652 = vpack.c.b16 %v1519, %v1512
    %v1653 = vpack.c.b16 %v1520, %v1513
    %v1654 = vpack.c.b16 %v1521, %v1514
    %v1655 = vpack.c.b16 %v1522, %v1515
    %v1656 = vpack.c.b16 %v1523, %v1516
    %v1657 = vpack.c.b16 %v1524, %v1517
    %v1658 = vpack.c.b16 %v1532, %v1525
    %v1659 = vpack.c.b16 %v1533, %v1526
    %v1660 = vpack.c.b16 %v1534, %v1527
    %v1661 = vpack.c.b16 %v1535, %v1528
    %v1662 = vpack.c.b16 %v1536, %v1529
    %v1663 = vpack.c.b16 %v1537, %v1530
    %v1664 = vpack.c.b16 %v1538, %v1531
    %v1665 = vpack.c.b16 %v1546, %v1539
    %v1666 = vpack.c.b16 %v1547, %v1540
    %v1667 = vpack.c.b16 %v1548, %v1541
    %v1668 = vpack.c.b16 %v1549, %v1542
    %v1669 = vpack.c.b16 %v1550, %v1543
    %v1670 = vpack.c.b16 %v1551, %v1544
    %v1671 = vpack.c.b16 %v1552, %v1545
    %v1672 = vpack.c.b16 %v1560, %v1553
    %v1673 = vpack.c.b16 %v1561, %v1554
    %v1674 = vpack.c.b16 %v1562, %v1555
    %v1675 = vpack.c.b16 %v1563, %v1556
    %v1676 = vpack.c.b16 %v1564, %v1557
    %v1677 = vpack.c.b16 %v1565, %v1558
    %v1678 = vpack.c.b16 %v1566, %v1559
    %1791 = vmatprep.subr.bf16.mxu0 %v1568
    %1792 = vmatpush1.bf16.msra.mxu0 %v1567
    %1793 = vmatprep.subr.bf16.mxu0 %v1575
    %1794 = vmatpush1.bf16.msra.mxu0 %v1574
    %1795 = vmatprep.subr.bf16.mxu0 %v1582
    %1796 = vmatpush1.bf16.msra.mxu0 %v1581
    %1797 = vmatprep.subr.bf16.mxu0 %v1589
    %1798 = vmatpush1.bf16.msra.mxu0 %v1588
    %1799 = vmatprep.subr.bf16.mxu0 %v1596
    %1800 = vmatpush1.bf16.msra.mxu0 %v1595
    %1801 = vmatprep.subr.bf16.mxu0 %v1603
    %1802 = vmatpush1.bf16.msra.mxu0 %v1602
    %1803 = vmatprep.subr.bf16.mxu0 %v1610
    %1804 = vmatpush1.bf16.msra.mxu0 %v1609
    %1805 = vmatprep.subr.bf16.mxu0 %v1617
    %1806 = vmatpush1.bf16.msra.mxu0 %v1616
    %1807 = vmatprep.subr.bf16.mxu0 %v1624
    %1808 = vmatpush1.bf16.msra.mxu0 %v1623
    %1809 = vmatprep.subr.bf16.mxu0 %v1631
    %1810 = vmatpush1.bf16.msra.mxu0 %v1630
    %1811 = vmatprep.subr.bf16.mxu0 %v1638
    %1812 = vmatpush1.bf16.msra.mxu0 %v1637
    %1813 = vmatprep.subr.bf16.mxu0 %v1645
    %1814 = vmatpush1.bf16.msra.mxu0 %v1644
    %1815 = vmatprep.subr.bf16.mxu0 %v1652
    %1816 = vmatpush1.bf16.msra.mxu0 %v1651
    %1817 = vmatprep.subr.bf16.mxu0 %v1659
    %1818 = vmatpush1.bf16.msra.mxu0 %v1658
    %1819 = vmatprep.subr.bf16.mxu0 %v1666
    %1820 = vmatpush1.bf16.msra.mxu0 %v1665
    %1821 = vmatprep.subr.bf16.mxu0 %v1673
    %1822 = vmatpush1.bf16.msra.mxu0 %v1672
    %1823 = vmatprep.mubr.bf16.mxu0 %v1043
    %1824 = vmatmul.mubr.bf16.gmra.mrb[0].mxu0 %v1042
    %v1825 = vpop.f32.mrb[0].mxu0
    %v1826 = vadd.f32 %v1183, %v1825
    %v1827 = vpop.f32.mrb[0].mxu0
    %v1828 = vadd.f32 %v1187, %v1827
    %v1829 = vpop.f32.mrb[0].mxu0
    %v1830 = vadd.f32 %v1183, %v1829
    %v1831 = vpop.f32.mrb[0].mxu0
    %v1832 = vadd.f32 %v1187, %v1831
    %1833 = vmatprep.mubr.bf16.mxu0 %v1045
    %1834 = vmatmul.mubr.bf16.gmra.mrb[0].mxu0 %v1044
    %v1835 = vpop.f32.mrb[0].mxu0
    %v1836 = vadd.f32 %v1183, %v1835
    %v1837 = vpop.f32.mrb[0].mxu0
    %v1838 = vadd.f32 %v1187, %v1837
    %v1839 = vpop.f32.mrb[0].mxu0
    %v1840 = vadd.f32 %v1183, %v1839
    %v1841 = vpop.f32.mrb[0].mxu0
    %v1842 = vadd.f32 %v1187, %v1841
    %1843 = vmatprep.mubr.bf16.mxu0 %v1047
    %1844 = vmatmul.mubr.bf16.gmra.mrb[0].mxu0 %v1046
    %v1845 = vpop.f32.mrb[0].mxu0
    %v1846 = vadd.f32 %v1183, %v1845
    %v1847 = vpop.f32.mrb[0].mxu0
    %v1848 = vadd.f32 %v1187, %v1847
    %v1849 = vpop.f32.mrb[0].mxu0
    %v1850 = vadd.f32 %v1183, %v1849
    %v1851 = vpop.f32.mrb[0].mxu0
    %v1852 = vadd.f32 %v1187, %v1851
    %1853 = vmatprep.mubr.bf16.mxu0 %v1049
    %1854 = vmatmul.mubr.bf16.gmra.mrb[0].mxu0 %v1048
    %v1855 = vpop.f32.mrb[0].mxu0
    %v1856 = vadd.f32 %v1183, %v1855
    %v1857 = vpop.f32.mrb[0].mxu0
    %v1858 = vadd.f32 %v1187, %v1857
    %v1859 = vpop.f32.mrb[0].mxu0
    %v1860 = vadd.f32 %v1183, %v1859
    %v1861 = vpop.f32.mrb[0].mxu0
    %v1862 = vadd.f32 %v1187, %v1861
    %1863 = vdwg.mxu0
    %1864 = vmatprep.subr.bf16.mxu0 %v1570
    %1865 = vmatpush1.bf16.msra.mxu0 %v1569
    %1866 = vmatprep.subr.bf16.mxu0 %v1577
    %1867 = vmatpush1.bf16.msra.mxu0 %v1576
    %1868 = vmatprep.subr.bf16.mxu0 %v1584
    %1869 = vmatpush1.bf16.msra.mxu0 %v1583
    %1870 = vmatprep.subr.bf16.mxu0 %v1591
    %1871 = vmatpush1.bf16.msra.mxu0 %v1590
    %1872 = vmatprep.subr.bf16.mxu0 %v1598
    %1873 = vmatpush1.bf16.msra.mxu0 %v1597
    %1874 = vmatprep.subr.bf16.mxu0 %v1605
    %1875 = vmatpush1.bf16.msra.mxu0 %v1604
    %1876 = vmatprep.subr.bf16.mxu0 %v1612
    %1877 = vmatpush1.bf16.msra.mxu0 %v1611
    %1878 = vmatprep.subr.bf16.mxu0 %v1619
    %1879 = vmatpush1.bf16.msra.mxu0 %v1618
    %1880 = vmatprep.subr.bf16.mxu0 %v1626
    %1881 = vmatpush1.bf16.msra.mxu0 %v1625
    %1882 = vmatprep.subr.bf16.mxu0 %v1633
    %1883 = vmatpush1.bf16.msra.mxu0 %v1632
    %1884 = vmatprep.subr.bf16.mxu0 %v1640
    %1885 = vmatpush1.bf16.msra.mxu0 %v1639
    %1886 = vmatprep.subr.bf16.mxu0 %v1647
    %1887 = vmatpush1.bf16.msra.mxu0 %v1646
    %1888 = vmatprep.subr.bf16.mxu0 %v1654
    %1889 = vmatpush1.bf16.msra.mxu0 %v1653
    %1890 = vmatprep.subr.bf16.mxu0 %v1661
    %1891 = vmatpush1.bf16.msra.mxu0 %v1660
    %1892 = vmatprep.subr.bf16.mxu0 %v1668
    %1893 = vmatpush1.bf16.msra.mxu0 %v1667
    %1894 = vmatprep.subr.bf16.mxu0 %v1675
    %1895 = vmatpush1.bf16.msra.mxu0 %v1674
    %1896 = vmatprep.mubr.bf16.mxu0 %v1043
    %1897 = vmatmul.mubr.bf16.gmra.mrb[0].mxu0 %v1042
    %v1898 = vpop.f32.mrb[0].mxu0
    %v1899 = vadd.f32 %v1191, %v1898
    %v1900 = vpop.f32.mrb[0].mxu0
    %v1901 = vadd.f32 %v1195, %v1900
    %v1902 = vpop.f32.mrb[0].mxu0
    %v1903 = vadd.f32 %v1191, %v1902
    %v1904 = vpop.f32.mrb[0].mxu0
    %v1905 = vadd.f32 %v1195, %v1904
    %1906 = vmatprep.mubr.bf16.mxu0 %v1045
    %1907 = vmatmul.mubr.bf16.gmra.mrb[0].mxu0 %v1044
    %v1908 = vpop.f32.mrb[0].mxu0
    %v1909 = vadd.f32 %v1191, %v1908
    %v1910 = vpop.f32.mrb[0].mxu0
    %v1911 = vadd.f32 %v1195, %v1910
    %v1912 = vpop.f32.mrb[0].mxu0
    %v1913 = vadd.f32 %v1191, %v1912
    %v1914 = vpop.f32.mrb[0].mxu0
    %v1915 = vadd.f32 %v1195, %v1914
    %1916 = vmatprep.mubr.bf16.mxu0 %v1047
    %1917 = vmatmul.mubr.bf16.gmra.mrb[0].mxu0 %v1046
    %v1918 = vpop.f32.mrb[0].mxu0
    %v1919 = vadd.f32 %v1191, %v1918
    %v1920 = vpop.f32.mrb[0].mxu0
    %v1921 = vadd.f32 %v1195, %v1920
    %v1922 = vpop.f32.mrb[0].mxu0
    %v1923 = vadd.f32 %v1191, %v1922
    %v1924 = vpop.f32.mrb[0].mxu0
    %v1925 = vadd.f32 %v1195, %v1924
    %1926 = vmatprep.mubr.bf16.mxu0 %v1049
    %1927 = vmatmul.mubr.bf16.gmra.mrb[0].mxu0 %v1048
    %v1928 = vpop.f32.mrb[0].mxu0
    %v1929 = vadd.f32 %v1191, %v1928
    %v1930 = vpop.f32.mrb[0].mxu0
    %v1931 = vadd.f32 %v1195, %v1930
    %v1932 = vpop.f32.mrb[0].mxu0
    %v1933 = vadd.f32 %v1191, %v1932
    %v1934 = vpop.f32.mrb[0].mxu0
    %v1935 = vadd.f32 %v1195, %v1934
    %1936 = vdwg.mxu0
    %1937 = vmatprep.subr.bf16.mxu0 %v1572
    %1938 = vmatpush1.bf16.msra.mxu0 %v1571
    %1939 = vmatprep.subr.bf16.mxu0 %v1579
    %1940 = vmatpush1.bf16.msra.mxu0 %v1578
    %1941 = vmatprep.subr.bf16.mxu0 %v1586
    %1942 = vmatpush1.bf16.msra.mxu0 %v1585
    %1943 = vmatprep.subr.bf16.mxu0 %v1593
    %1944 = vmatpush1.bf16.msra.mxu0 %v1592
    %1945 = vmatprep.subr.bf16.mxu0 %v1600
    %1946 = vmatpush1.bf16.msra.mxu0 %v1599
    %1947 = vmatprep.subr.bf16.mxu0 %v1607
    %1948 = vmatpush1.bf16.msra.mxu0 %v1606
    %1949 = vmatprep.subr.bf16.mxu0 %v1614
    %1950 = vmatpush1.bf16.msra.mxu0 %v1613
    %1951 = vmatprep.subr.bf16.mxu0 %v1621
    %1952 = vmatpush1.bf16.msra.mxu0 %v1620
    %1953 = vmatprep.subr.bf16.mxu0 %v1628
    %1954 = vmatpush1.bf16.msra.mxu0 %v1627
    %1955 = vmatprep.subr.bf16.mxu0 %v1635
    %1956 = vmatpush1.bf16.msra.mxu0 %v1634
    %1957 = vmatprep.subr.bf16.mxu0 %v1642
    %1958 = vmatpush1.bf16.msra.mxu0 %v1641
    %1959 = vmatprep.subr.bf16.mxu0 %v1649
    %1960 = vmatpush1.bf16.msra.mxu0 %v1648
    %1961 = vmatprep.subr.bf16.mxu0 %v1656
    %1962 = vmatpush1.bf16.msra.mxu0 %v1655
    %1963 = vmatprep.subr.bf16.mxu0 %v1663
    %1964 = vmatpush1.bf16.msra.mxu0 %v1662
    %1965 = vmatprep.subr.bf16.mxu0 %v1670
    %1966 = vmatpush1.bf16.msra.mxu0 %v1669
    %1967 = vmatprep.subr.bf16.mxu0 %v1677
    %1968 = vmatpush1.bf16.msra.mxu0 %v1676
    %1969 = vmatprep.mubr.bf16.mxu0 %v1043
    %1970 = vmatmul.mubr.bf16.gmra.mrb[0].mxu0 %v1042
    %v1971 = vpop.f32.mrb[0].mxu0
    %v1972 = vadd.f32 %v1199, %v1971
    %v1973 = vpop.f32.mrb[0].mxu0
    %v1974 = vadd.f32 %v1203, %v1973
    %v1975 = vpop.f32.mrb[0].mxu0
    %v1976 = vadd.f32 %v1199, %v1975
    %v1977 = vpop.f32.mrb[0].mxu0
    %v1978 = vadd.f32 %v1203, %v1977
    %1979 = vmatprep.mubr.bf16.mxu0 %v1045
    %1980 = vmatmul.mubr.bf16.gmra.mrb[0].mxu0 %v1044
    %v1981 = vpop.f32.mrb[0].mxu0
    %v1982 = vadd.f32 %v1199, %v1981
    %v1983 = vpop.f32.mrb[0].mxu0
    %v1984 = vadd.f32 %v1203, %v1983
    %v1985 = vpop.f32.mrb[0].mxu0
    %v1986 = vadd.f32 %v1199, %v1985
    %v1987 = vpop.f32.mrb[0].mxu0
    %v1988 = vadd.f32 %v1203, %v1987
    %1989 = vmatprep.mubr.bf16.mxu0 %v1047
    %1990 = vmatmul.mubr.bf16.gmra.mrb[0].mxu0 %v1046
    %v1991 = vpop.f32.mrb[0].mxu0
    %v1992 = vadd.f32 %v1199, %v1991
    %v1993 = vpop.f32.mrb[0].mxu0
    %v1994 = vadd.f32 %v1203, %v1993
    %v1995 = vpop.f32.mrb[0].mxu0
    %v1996 = vadd.f32 %v1199, %v1995
    %v1997 = vpop.f32.mrb[0].mxu0
    %v1998 = vadd.f32 %v1203, %v1997
    %1999 = vmatprep.mubr.bf16.mxu0 %v1049
    %2000 = vmatmul.mubr.bf16.gmra.mrb[0].mxu0 %v1048
    %v2001 = vpop.f32.mrb[0].mxu0
    %v2002 = vadd.f32 %v1199, %v2001
    %v2003 = vpop.f32.mrb[0].mxu0
    %v2004 = vadd.f32 %v1203, %v2003
    %v2005 = vpop.f32.mrb[0].mxu0
    %v2006 = vadd.f32 %v1199, %v2005
    %v2007 = vpop.f32.mrb[0].mxu0
    %v2008 = vadd.f32 %v1203, %v2007
    %2009 = vdwg.mxu0
    %2010 = vmatprep.subr.bf16.mxu0 0
    %2011 = vmatpush1.bf16.msra.mxu0 %v1573
    %2012 = vmatprep.subr.bf16.mxu0 0
    %2013 = vmatpush1.bf16.msra.mxu0 %v1580
    %2014 = vmatprep.subr.bf16.mxu0 0
    %2015 = vmatpush1.bf16.msra.mxu0 %v1587
    %2016 = vmatprep.subr.bf16.mxu0 0
    %2017 = vmatpush1.bf16.msra.mxu0 %v1594
    %2018 = vmatprep.subr.bf16.mxu0 0
    %2019 = vmatpush1.bf16.msra.mxu0 %v1601
    %2020 = vmatprep.subr.bf16.mxu0 0
    %2021 = vmatpush1.bf16.msra.mxu0 %v1608
    %2022 = vmatprep.subr.bf16.mxu0 0
    %2023 = vmatpush1.bf16.msra.mxu0 %v1615
    %2024 = vmatprep.subr.bf16.mxu0 0
    %2025 = vmatpush1.bf16.msra.mxu0 %v1622
    %2026 = vmatprep.subr.bf16.mxu0 0
    %2027 = vmatpush1.bf16.msra.mxu0 %v1629
    %2028 = vmatprep.subr.bf16.mxu0 0
    %2029 = vmatpush1.bf16.msra.mxu0 %v1636
    %2030 = vmatprep.subr.bf16.mxu0 0
    %2031 = vmatpush1.bf16.msra.mxu0 %v1643
    %2032 = vmatprep.subr.bf16.mxu0 0
    %2033 = vmatpush1.bf16.msra.mxu0 %v1650
    %2034 = vmatprep.subr.bf16.mxu0 0
    %2035 = vmatpush1.bf16.msra.mxu0 %v1657
    %2036 = vmatprep.subr.bf16.mxu0 0
    %2037 = vmatpush1.bf16.msra.mxu0 %v1664
    %2038 = vmatprep.subr.bf16.mxu0 0
    %2039 = vmatpush1.bf16.msra.mxu0 %v1671
    %2040 = vmatprep.subr.bf16.mxu0 0
    %2041 = vmatpush1.bf16.msra.mxu0 %v1678
    %2042 = vmatprep.mubr.bf16.mxu0 %v1043
    %2043 = vmatmul.mubr.bf16.gmra.mrb[0].mxu0 %v1042
    %v2044 = vpop.f32.mrb[0].mxu0
    %v2045 = vadd.f32 %v1207, %v2044
    %v2046 = vpop.f32.mrb[0].mxu0
    %v2047 = vpop.f32.mrb[0].mxu0
    %v2048 = vadd.f32 %v1207, %v2047
    %v2049 = vpop.f32.mrb[0].mxu0
    %2050 = vmatprep.mubr.bf16.mxu0 %v1045
    %2051 = vmatmul.mubr.bf16.gmra.mrb[0].mxu0 %v1044
    %v2052 = vpop.f32.mrb[0].mxu0
    %v2053 = vadd.f32 %v1207, %v2052
    %v2054 = vpop.f32.mrb[0].mxu0
    %v2055 = vpop.f32.mrb[0].mxu0
    %v2056 = vadd.f32 %v1207, %v2055
    %v2057 = vpop.f32.mrb[0].mxu0
    %2058 = vmatprep.mubr.bf16.mxu0 %v1047
    %2059 = vmatmul.mubr.bf16.gmra.mrb[0].mxu0 %v1046
    %v2060 = vpop.f32.mrb[0].mxu0
    %v2061 = vadd.f32 %v1207, %v2060
    %v2062 = vpop.f32.mrb[0].mxu0
    %v2063 = vpop.f32.mrb[0].mxu0
    %v2064 = vadd.f32 %v1207, %v2063
    %v2065 = vpop.f32.mrb[0].mxu0
    %2066 = vmatprep.mubr.bf16.mxu0 %v1049
    %2067 = vmatmul.mubr.bf16.gmra.mrb[0].mxu0 %v1048
    %v2068 = vpop.f32.mrb[0].mxu0
    %v2069 = vadd.f32 %v1207, %v2068
    %v2070 = vpop.f32.mrb[0].mxu0
    %v2071 = vpop.f32.mrb[0].mxu0
    %v2072 = vadd.f32 %v1207, %v2071
    %v2073 = vpop.f32.mrb[0].mxu0
    %2074 = vdwg.mxu0
    %v2075 = vxor.u32 %v1826, 2147483648
    %v2076 = vxor.u32 %v1828, 2147483648
    %v2077 = vxor.u32 %v1899, 2147483648
    %v2078 = vxor.u32 %v1901, 2147483648
    %v2079 = vxor.u32 %v1972, 2147483648
    %v2080 = vxor.u32 %v1974, 2147483648
    %v2081 = vxor.u32 %v2045, 2147483648
    %v2082 = vxor.u32 %v1830, 2147483648
    %v2083 = vxor.u32 %v1832, 2147483648
    %v2084 = vxor.u32 %v1903, 2147483648
    %v2085 = vxor.u32 %v1905, 2147483648
    %v2086 = vxor.u32 %v1976, 2147483648
    %v2087 = vxor.u32 %v1978, 2147483648
    %v2088 = vxor.u32 %v2048, 2147483648
    %v2089 = vxor.u32 %v1836, 2147483648
    %v2090 = vxor.u32 %v1838, 2147483648
    %v2091 = vxor.u32 %v1909, 2147483648
    %v2092 = vxor.u32 %v1911, 2147483648
    %v2093 = vxor.u32 %v1982, 2147483648
    %v2094 = vxor.u32 %v1984, 2147483648
    %v2095 = vxor.u32 %v2053, 2147483648
    %v2096 = vxor.u32 %v1840, 2147483648
    %v2097 = vxor.u32 %v1842, 2147483648
    %v2098 = vxor.u32 %v1913, 2147483648
    %v2099 = vxor.u32 %v1915, 2147483648
    %v2100 = vxor.u32 %v1986, 2147483648
    %v2101 = vxor.u32 %v1988, 2147483648
    %v2102 = vxor.u32 %v2056, 2147483648
    %v2103 = vxor.u32 %v1846, 2147483648
    %v2104 = vxor.u32 %v1848, 2147483648
    %v2105 = vxor.u32 %v1919, 2147483648
    %v2106 = vxor.u32 %v1921, 2147483648
    %v2107 = vxor.u32 %v1992, 2147483648
    %v2108 = vxor.u32 %v1994, 2147483648
    %v2109 = vxor.u32 %v2061, 2147483648
    %v2110 = vxor.u32 %v1850, 2147483648
    %v2111 = vxor.u32 %v1852, 2147483648
    %v2112 = vxor.u32 %v1923, 2147483648
    %v2113 = vxor.u32 %v1925, 2147483648
    %v2114 = vxor.u32 %v1996, 2147483648
    %v2115 = vxor.u32 %v1998, 2147483648
    %v2116 = vxor.u32 %v2064, 2147483648
    %v2117 = vxor.u32 %v1856, 2147483648
    %v2118 = vxor.u32 %v1858, 2147483648
    %v2119 = vxor.u32 %v1929, 2147483648
    %v2120 = vxor.u32 %v1931, 2147483648
    %v2121 = vxor.u32 %v2002, 2147483648
    %v2122 = vxor.u32 %v2004, 2147483648
    %v2123 = vxor.u32 %v2069, 2147483648
    %v2124 = vxor.u32 %v1860, 2147483648
    %v2125 = vxor.u32 %v1862, 2147483648
    %v2126 = vxor.u32 %v1933, 2147483648
    %v2127 = vxor.u32 %v1935, 2147483648
    %v2128 = vxor.u32 %v2006, 2147483648
    %v2129 = vxor.u32 %v2008, 2147483648
    %v2130 = vxor.u32 %v2072, 2147483648
    %v2131 = vmul.f32 %v2075, 1.442695
    %v2132 = vpow.pop %v2131
    %v2133 = vmul.f32 %v2076, 1.442695
    %v2134 = vpow.pop %v2133
    %v2135 = vmul.f32 %v2077, 1.442695
    %v2136 = vpow.pop %v2135
    %v2137 = vmul.f32 %v2078, 1.442695
    %v2138 = vpow.pop %v2137
    %v2139 = vmul.f32 %v2079, 1.442695
    %v2140 = vpow.pop %v2139
    %v2141 = vmul.f32 %v2080, 1.442695
    %v2142 = vpow.pop %v2141
    %v2143 = vmul.f32 %v2081, 1.442695
    %v2144 = vpow.pop %v2143
    %v2145 = vmul.f32 %v2082, 1.442695
    %v2146 = vpow.pop %v2145
    %v2147 = vmul.f32 %v2083, 1.442695
    %v2148 = vpow.pop %v2147
    %v2149 = vmul.f32 %v2084, 1.442695
    %v2150 = vpow.pop %v2149
    %v2151 = vmul.f32 %v2085, 1.442695
    %v2152 = vpow.pop %v2151
    %v2153 = vmul.f32 %v2086, 1.442695
    %v2154 = vpow.pop %v2153
    %v2155 = vmul.f32 %v2087, 1.442695
    %v2156 = vpow.pop %v2155
    %v2157 = vmul.f32 %v2088, 1.442695
    %v2158 = vpow.pop %v2157
    %v2159 = vmul.f32 %v2089, 1.442695
    %v2160 = vpow.pop %v2159
    %v2161 = vmul.f32 %v2090, 1.442695
    %v2162 = vpow.pop %v2161
    %v2163 = vmul.f32 %v2091, 1.442695
    %v2164 = vpow.pop %v2163
    %v2165 = vmul.f32 %v2092, 1.442695
    %v2166 = vpow.pop %v2165
    %v2167 = vmul.f32 %v2093, 1.442695
    %v2168 = vpow.pop %v2167
    %v2169 = vmul.f32 %v2094, 1.442695
    %v2170 = vpow.pop %v2169
    %v2171 = vmul.f32 %v2095, 1.442695
    %v2172 = vpow.pop %v2171
    %v2173 = vmul.f32 %v2096, 1.442695
    %v2174 = vpow.pop %v2173
    %v2175 = vmul.f32 %v2097, 1.442695
    %v2176 = vpow.pop %v2175
    %v2177 = vmul.f32 %v2098, 1.442695
    %v2178 = vpow.pop %v2177
    %v2179 = vmul.f32 %v2099, 1.442695
    %v2180 = vpow.pop %v2179
    %v2181 = vmul.f32 %v2100, 1.442695
    %v2182 = vpow.pop %v2181
    %v2183 = vmul.f32 %v2101, 1.442695
    %v2184 = vpow.pop %v2183
    %v2185 = vmul.f32 %v2102, 1.442695
    %v2186 = vpow.pop %v2185
    %v2187 = vmul.f32 %v2103, 1.442695
    %v2188 = vpow.pop %v2187
    %v2189 = vmul.f32 %v2104, 1.442695
    %v2190 = vpow.pop %v2189
    %v2191 = vmul.f32 %v2105, 1.442695
    %v2192 = vpow.pop %v2191
    %v2193 = vmul.f32 %v2106, 1.442695
    %v2194 = vpow.pop %v2193
    %v2195 = vmul.f32 %v2107, 1.442695
    %v2196 = vpow.pop %v2195
    %v2197 = vmul.f32 %v2108, 1.442695
    %v2198 = vpow.pop %v2197
    %v2199 = vmul.f32 %v2109, 1.442695
    %v2200 = vpow.pop %v2199
    %v2201 = vmul.f32 %v2110, 1.442695
    %v2202 = vpow.pop %v2201
    %v2203 = vmul.f32 %v2111, 1.442695
    %v2204 = vpow.pop %v2203
    %v2205 = vmul.f32 %v2112, 1.442695
    %v2206 = vpow.pop %v2205
    %v2207 = vmul.f32 %v2113, 1.442695
    %v2208 = vpow.pop %v2207
    %v2209 = vmul.f32 %v2114, 1.442695
    %v2210 = vpow.pop %v2209
    %v2211 = vmul.f32 %v2115, 1.442695
    %v2212 = vpow.pop %v2211
    %v2213 = vmul.f32 %v2116, 1.442695
    %v2214 = vpow.pop %v2213
    %v2215 = vmul.f32 %v2117, 1.442695
    %v2216 = vpow.pop %v2215
    %v2217 = vmul.f32 %v2118, 1.442695
    %v2218 = vpow.pop %v2217
    %v2219 = vmul.f32 %v2119, 1.442695
    %v2220 = vpow.pop %v2219
    %v2221 = vmul.f32 %v2120, 1.442695
    %v2222 = vpow.pop %v2221
    %v2223 = vmul.f32 %v2121, 1.442695
    %v2224 = vpow.pop %v2223
    %v2225 = vmul.f32 %v2122, 1.442695
    %v2226 = vpow.pop %v2225
    %v2227 = vmul.f32 %v2123, 1.442695
    %v2228 = vpow.pop %v2227
    %v2229 = vmul.f32 %v2124, 1.442695
    %v2230 = vpow.pop %v2229
    %v2231 = vmul.f32 %v2125, 1.442695
    %v2232 = vpow.pop %v2231
    %v2233 = vmul.f32 %v2126, 1.442695
    %v2234 = vpow.pop %v2233
    %v2235 = vmul.f32 %v2127, 1.442695
    %v2236 = vpow.pop %v2235
    %v2237 = vmul.f32 %v2128, 1.442695
    %v2238 = vpow.pop %v2237
    %v2239 = vmul.f32 %v2129, 1.442695
    %v2240 = vpow.pop %v2239
    %v2241 = vmul.f32 %v2130, 1.442695
    %v2242 = vpow.pop %v2241
    %v2243 = vadd.f32 %v2132, 1.0
    %v2244 = vadd.f32 %v2134, 1.0
    %v2245 = vadd.f32 %v2136, 1.0
    %v2246 = vadd.f32 %v2138, 1.0
    %v2247 = vadd.f32 %v2140, 1.0
    %v2248 = vadd.f32 %v2142, 1.0
    %v2249 = vadd.f32 %v2144, 1.0
    %v2250 = vadd.f32 %v2146, 1.0
    %v2251 = vadd.f32 %v2148, 1.0
    %v2252 = vadd.f32 %v2150, 1.0
    %v2253 = vadd.f32 %v2152, 1.0
    %v2254 = vadd.f32 %v2154, 1.0
    %v2255 = vadd.f32 %v2156, 1.0
    %v2256 = vadd.f32 %v2158, 1.0
    %v2257 = vadd.f32 %v2160, 1.0
    %v2258 = vadd.f32 %v2162, 1.0
    %v2259 = vadd.f32 %v2164, 1.0
    %v2260 = vadd.f32 %v2166, 1.0
    %v2261 = vadd.f32 %v2168, 1.0
    %v2262 = vadd.f32 %v2170, 1.0
    %v2263 = vadd.f32 %v2172, 1.0
    %v2264 = vadd.f32 %v2174, 1.0
    %v2265 = vadd.f32 %v2176, 1.0
    %v2266 = vadd.f32 %v2178, 1.0
    %v2267 = vadd.f32 %v2180, 1.0
    %v2268 = vadd.f32 %v2182, 1.0
    %v2269 = vadd.f32 %v2184, 1.0
    %v2270 = vadd.f32 %v2186, 1.0
    %v2271 = vadd.f32 %v2188, 1.0
    %v2272 = vadd.f32 %v2190, 1.0
    %v2273 = vadd.f32 %v2192, 1.0
    %v2274 = vadd.f32 %v2194, 1.0
    %v2275 = vadd.f32 %v2196, 1.0
    %v2276 = vadd.f32 %v2198, 1.0
    %v2277 = vadd.f32 %v2200, 1.0
    %v2278 = vadd.f32 %v2202, 1.0
    %v2279 = vadd.f32 %v2204, 1.0
    %v2280 = vadd.f32 %v2206, 1.0
    %v2281 = vadd.f32 %v2208, 1.0
    %v2282 = vadd.f32 %v2210, 1.0
    %v2283 = vadd.f32 %v2212, 1.0
    %v2284 = vadd.f32 %v2214, 1.0
    %v2285 = vadd.f32 %v2216, 1.0
    %v2286 = vadd.f32 %v2218, 1.0
    %v2287 = vadd.f32 %v2220, 1.0
    %v2288 = vadd.f32 %v2222, 1.0
    %v2289 = vadd.f32 %v2224, 1.0
    %v2290 = vadd.f32 %v2226, 1.0
    %v2291 = vadd.f32 %v2228, 1.0
    %v2292 = vadd.f32 %v2230, 1.0
    %v2293 = vadd.f32 %v2232, 1.0
    %v2294 = vadd.f32 %v2234, 1.0
    %v2295 = vadd.f32 %v2236, 1.0
    %v2296 = vadd.f32 %v2238, 1.0
    %v2297 = vadd.f32 %v2240, 1.0
    %v2298 = vadd.f32 %v2242, 1.0
    %v2299 = vrcp.pop %v2243
    %v2300 = vmul.f32 1.0, %v2299
    %v2301 = vrcp.pop %v2244
    %v2302 = vmul.f32 1.0, %v2301
    %v2303 = vrcp.pop %v2245
    %v2304 = vmul.f32 1.0, %v2303
    %v2305 = vrcp.pop %v2246
    %v2306 = vmul.f32 1.0, %v2305
    %v2307 = vrcp.pop %v2247
    %v2308 = vmul.f32 1.0, %v2307
    %v2309 = vrcp.pop %v2248
    %v2310 = vmul.f32 1.0, %v2309
    %v2311 = vrcp.pop %v2249
    %v2312 = vmul.f32 1.0, %v2311
    %v2313 = vrcp.pop %v2250
    %v2314 = vmul.f32 1.0, %v2313
    %v2315 = vrcp.pop %v2251
    %v2316 = vmul.f32 1.0, %v2315
    %v2317 = vrcp.pop %v2252
    %v2318 = vmul.f32 1.0, %v2317
    %v2319 = vrcp.pop %v2253
    %v2320 = vmul.f32 1.0, %v2319
    %v2321 = vrcp.pop %v2254
    %v2322 = vmul.f32 1.0, %v2321
    %v2323 = vrcp.pop %v2255
    %v2324 = vmul.f32 1.0, %v2323
    %v2325 = vrcp.pop %v2256
    %v2326 = vmul.f32 1.0, %v2325
    %v2327 = vrcp.pop %v2257
    %v2328 = vmul.f32 1.0, %v2327
    %v2329 = vrcp.pop %v2258
    %v2330 = vmul.f32 1.0, %v2329
    %v2331 = vrcp.pop %v2259
    %v2332 = vmul.f32 1.0, %v2331
    %v2333 = vrcp.pop %v2260
    %v2334 = vmul.f32 1.0, %v2333
    %v2335 = vrcp.pop %v2261
    %v2336 = vmul.f32 1.0, %v2335
    %v2337 = vrcp.pop %v2262
    %v2338 = vmul.f32 1.0, %v2337
    %v2339 = vrcp.pop %v2263
    %v2340 = vmul.f32 1.0, %v2339
    %v2341 = vrcp.pop %v2264
    %v2342 = vmul.f32 1.0, %v2341
    %v2343 = vrcp.pop %v2265
    %v2344 = vmul.f32 1.0, %v2343
    %v2345 = vrcp.pop %v2266
    %v2346 = vmul.f32 1.0, %v2345
    %v2347 = vrcp.pop %v2267
    %v2348 = vmul.f32 1.0, %v2347
    %v2349 = vrcp.pop %v2268
    %v2350 = vmul.f32 1.0, %v2349
    %v2351 = vrcp.pop %v2269
    %v2352 = vmul.f32 1.0, %v2351
    %v2353 = vrcp.pop %v2270
    %v2354 = vmul.f32 1.0, %v2353
    %v2355 = vrcp.pop %v2271
    %v2356 = vmul.f32 1.0, %v2355
    %v2357 = vrcp.pop %v2272
    %v2358 = vmul.f32 1.0, %v2357
    %v2359 = vrcp.pop %v2273
    %v2360 = vmul.f32 1.0, %v2359
    %v2361 = vrcp.pop %v2274
    %v2362 = vmul.f32 1.0, %v2361
    %v2363 = vrcp.pop %v2275
    %v2364 = vmul.f32 1.0, %v2363
    %v2365 = vrcp.pop %v2276
    %v2366 = vmul.f32 1.0, %v2365
    %v2367 = vrcp.pop %v2277
    %v2368 = vmul.f32 1.0, %v2367
    %v2369 = vrcp.pop %v2278
    %v2370 = vmul.f32 1.0, %v2369
    %v2371 = vrcp.pop %v2279
    %v2372 = vmul.f32 1.0, %v2371
    %v2373 = vrcp.pop %v2280
    %v2374 = vmul.f32 1.0, %v2373
    %v2375 = vrcp.pop %v2281
    %v2376 = vmul.f32 1.0, %v2375
    %v2377 = vrcp.pop %v2282
    %v2378 = vmul.f32 1.0, %v2377
    %v2379 = vrcp.pop %v2283
    %v2380 = vmul.f32 1.0, %v2379
    %v2381 = vrcp.pop %v2284
    %v2382 = vmul.f32 1.0, %v2381
    %v2383 = vrcp.pop %v2285
    %v2384 = vmul.f32 1.0, %v2383
    %v2385 = vrcp.pop %v2286
    %v2386 = vmul.f32 1.0, %v2385
    %v2387 = vrcp.pop %v2287
    %v2388 = vmul.f32 1.0, %v2387
    %v2389 = vrcp.pop %v2288
    %v2390 = vmul.f32 1.0, %v2389
    %v2391 = vrcp.pop %v2289
    %v2392 = vmul.f32 1.0, %v2391
    %v2393 = vrcp.pop %v2290
    %v2394 = vmul.f32 1.0, %v2393
    %v2395 = vrcp.pop %v2291
    %v2396 = vmul.f32 1.0, %v2395
    %v2397 = vrcp.pop %v2292
    %v2398 = vmul.f32 1.0, %v2397
    %v2399 = vrcp.pop %v2293
    %v2400 = vmul.f32 1.0, %v2399
    %v2401 = vrcp.pop %v2294
    %v2402 = vmul.f32 1.0, %v2401
    %v2403 = vrcp.pop %v2295
    %v2404 = vmul.f32 1.0, %v2403
    %v2405 = vrcp.pop %v2296
    %v2406 = vmul.f32 1.0, %v2405
    %v2407 = vrcp.pop %v2297
    %v2408 = vmul.f32 1.0, %v2407
    %v2409 = vrcp.pop %v2298
    %v2410 = vmul.f32 1.0, %v2409
    %2411 = vst [vmem:[#allocation7] sm:$0xff] %v2300
    %2412 = vst [vmem:[#allocation7 + $0x8] sm:$0xff] %v2302
    %2413 = vst [vmem:[#allocation7 + $0x10] sm:$0xff] %v2304
    %2414 = vst [vmem:[#allocation7 + $0x18] sm:$0xff] %v2306
    %2415 = vst [vmem:[#allocation7 + $0x20] sm:$0xff] %v2308
    %2416 = vst [vmem:[#allocation7 + $0x28] sm:$0xff] %v2310
    %2417 = vst [vmem:[#allocation7 + $0x30] sm:$0xff] %v2312
    %2418 = vst [vmem:[#allocation7 + $0x38] sm:$0xff] %v2314
    %2419 = vst [vmem:[#allocation7 + $0x40] sm:$0xff] %v2316
    %2420 = vst [vmem:[#allocation7 + $0x48] sm:$0xff] %v2318
    %2421 = vst [vmem:[#allocation7 + $0x50] sm:$0xff] %v2320
    %2422 = vst [vmem:[#allocation7 + $0x58] sm:$0xff] %v2322
    %2423 = vst [vmem:[#allocation7 + $0x60] sm:$0xff] %v2324
    %2424 = vst [vmem:[#allocation7 + $0x68] sm:$0xff] %v2326
    %2425 = vst [vmem:[#allocation7 + $0x70] sm:$0xff] %v2328
    %2426 = vst [vmem:[#allocation7 + $0x78] sm:$0xff] %v2330
    %2427 = vst [vmem:[#allocation7 + $0x80] sm:$0xff] %v2332
    %2428 = vst [vmem:[#allocation7 + $0x88] sm:$0xff] %v2334
    %2429 = vst [vmem:[#allocation7 + $0x90] sm:$0xff] %v2336
    %2430 = vst [vmem:[#allocation7 + $0x98] sm:$0xff] %v2338
    %2431 = vst [vmem:[#allocation7 + $0xa0] sm:$0xff] %v2340
    %2432 = vst [vmem:[#allocation7 + $0xa8] sm:$0xff] %v2342
    %2433 = vst [vmem:[#allocation7 + $0xb0] sm:$0xff] %v2344
    %2434 = vst [vmem:[#allocation7 + $0xb8] sm:$0xff] %v2346
    %2435 = vst [vmem:[#allocation7 + $0xc0] sm:$0xff] %v2348
    %2436 = vst [vmem:[#allocation7 + $0xc8] sm:$0xff] %v2350
    %2437 = vst [vmem:[#allocation7 + $0xd0] sm:$0xff] %v2352
    %2438 = vst [vmem:[#allocation7 + $0xd8] sm:$0xff] %v2354
    %2439 = vst [vmem:[#allocation7 + $0xe0] sm:$0xff] %v2356
    %2440 = vst [vmem:[#allocation7 + $0xe8] sm:$0xff] %v2358
    %2441 = vst [vmem:[#allocation7 + $0xf0] sm:$0xff] %v2360
    %2442 = vst [vmem:[#allocation7 + $0xf8] sm:$0xff] %v2362
    %2443 = vst [vmem:[#allocation7 + $0x100] sm:$0xff] %v2364
    %2444 = vst [vmem:[#allocation7 + $0x108] sm:$0xff] %v2366
    %2445 = vst [vmem:[#allocation7 + $0x110] sm:$0xff] %v2368
    %2446 = vst [vmem:[#allocation7 + $0x118] sm:$0xff] %v2370
    %2447 = vst [vmem:[#allocation7 + $0x120] sm:$0xff] %v2372
    %2448 = vst [vmem:[#allocation7 + $0x128] sm:$0xff] %v2374
    %2449 = vst [vmem:[#allocation7 + $0x130] sm:$0xff] %v2376
    %2450 = vst [vmem:[#allocation7 + $0x138] sm:$0xff] %v2378
    %2451 = vst [vmem:[#allocation7 + $0x140] sm:$0xff] %v2380
    %2452 = vst [vmem:[#allocation7 + $0x148] sm:$0xff] %v2382
    %2453 = vst [vmem:[#allocation7 + $0x150] sm:$0xff] %v2384
    %2454 = vst [vmem:[#allocation7 + $0x158] sm:$0xff] %v2386
    %2455 = vst [vmem:[#allocation7 + $0x160] sm:$0xff] %v2388
    %2456 = vst [vmem:[#allocation7 + $0x168] sm:$0xff] %v2390
    %2457 = vst [vmem:[#allocation7 + $0x170] sm:$0xff] %v2392
    %2458 = vst [vmem:[#allocation7 + $0x178] sm:$0xff] %v2394
    %2459 = vst [vmem:[#allocation7 + $0x180] sm:$0xff] %v2396
    %2460 = vst [vmem:[#allocation7 + $0x188] sm:$0xff] %v2398
    %2461 = vst [vmem:[#allocation7 + $0x190] sm:$0xff] %v2400
    %2462 = vst [vmem:[#allocation7 + $0x198] sm:$0xff] %v2402
    %2463 = vst [vmem:[#allocation7 + $0x1a0] sm:$0xff] %v2404
    %2464 = vst [vmem:[#allocation7 + $0x1a8] sm:$0xff] %v2406
    %2465 = vst [vmem:[#allocation7 + $0x1b0] sm:$0xff] %v2408
    %2466 = vst [vmem:[#allocation7 + $0x1b8] sm:$0xff] %v2410
    // Predicated region
    $region54: #{generator_forward.1} parent=1 // pred_check
      _
    $region55: #{generator_forward.1} parent=1 // pred_check_branch
      %2468 = sbr.rel (0) target = $region57
    $region56: #{generator_forward.1} parent=1 // pred_region
      %s2470 = ssub.s32 7168, 7168
      %2471 = vsyncadd [#allocation4], %s2470
      %s2472 = sshll.u32 [#allocation7], 4
      %s2473 = int_to_ptr.vmem [resolvable:$true] %s2472
      %2478 = dma.vmem_to_hbm [thread:$0]  %s2473, 7168, %s11, [#allocation4], 896, 896, 56
    $region57: #{generator_forward.1} parent=1 // pred_fallthru
      _
    // Predicated region
    $region58: #{generator_forward.1} parent=1 // pred_check
      _
    $region59: #{generator_forward.1} parent=1 // pred_check_branch
      %2480 = sbr.rel (0) target = $region61
    $region60: #{generator_forward.1} parent=1 // pred_region
      %2481 = dma.done [#allocation4], 7168
    $region61: #{generator_forward.1} parent=1 // pred_fallthru
      _
    %2482 = vsyncpa [#allocation3], 1
    %2483 = vsyncpa [#allocation6], 1
    %2484 = vsyncpa [#allocation4], 1

</llo_original>
